<compile_context>
chip_gen: v7x
topology: tpu7x:2x2x1
jax: 0.10.0
libtpu: 0.0.40
codegen_flags: <defaults>
</compile_context>

<pallas_src>
import functools

import jax
import jax.numpy as jnp
from jax.experimental import pallas as pl
from jax.experimental.pallas import tpu as pltpu


# ------------------------------ fused kernel --------------------------------

def _dscfem_kernel(x_ref, mask_ref,
                   w12_ref, b12_ref,            # merged cv1 + cv2
                   ws12_ref, bs12_ref,          # merged s_cv1 + s_cv2
                   wb1_ref, bb1_ref,            # bottleneck 3x3 #1, (c_, 9c_)
                   wb2_ref, bb2_ref,            # bottleneck 3x3 #2, (c_, 9c_)
                   ws3_ref, bs3_ref,            # s_cv3 unsplit (c_, 2c_)
                   w3_ref, b3_ref,              # cv3   unsplit (c2, 2c_)
                   o_ref, *, H, W, c_):
    hw = H * W
    f32 = jnp.float32
    bf16 = jnp.bfloat16

    def silu(v):
        return v * jax.nn.sigmoid(v)

    def mm(w_ref, v):
        # bf16 x bf16 MXU dot, f32 accumulation.
        return jnp.dot(w_ref[...], v.astype(bf16), preferred_element_type=f32)

    x = x_ref[...].astype(f32)                        # (c1, hw), lane-dense
    masks = mask_ref[...]                             # (9, hw) f32 zero-pad masks

    # --- merged cv1 + cv2 (shared input x, one MXU push) ---------------------
    y12 = silu(mm(w12_ref, x) + b12_ref[...])         # (2c_, hw)
    # NOTE: real YOLO configs have c_ % 8 == 0, making these splits vreg-aligned.
    y1, y2 = y12[:c_], y12[c_:]

    # --- inner SCFEM: merged s_cv1 + s_cv2 (shared input y1) -----------------
    ab = silu(mm(ws12_ref, y1) + bs12_ref[...])       # (2c_, hw)
    a, b = ab[:c_], ab[c_:]

    # --- Bottleneck: 3x3 "same" conv as ONE matmul over 9 stacked taps -------
    def conv3x3(w_ref, b_ref, v):
        taps = []
        k = 0
        for dy in (-1, 0, 1):
            for dx in (-1, 0, 1):
                s = dy * W + dx                       # flat shift within image
                if s == 0:
                    taps.append(v)
                else:
                    shifted = pltpu.roll(v, (-s) % hw, 1)      # XLU rotate
                    taps.append(shifted * masks[k:k + 1])      # zero-pad mask
                k += 1
        stacked = jnp.concatenate(taps, axis=0)       # (9*c_, hw) in VMEM
        return mm(w_ref, stacked) + b_ref[...]        # single K = 9*c_ dot

    t = silu(conv3x3(wb1_ref, bb1_ref, a))
    u = a + silu(conv3x3(wb2_ref, bb2_ref, t))        # shortcut add in VMEM

    # --- s_cv3 over cat(u, b): in-VMEM sublane concat, one full-K dot --------
    z = silu(mm(ws3_ref, jnp.concatenate([u, b], axis=0)) + bs3_ref[...])

    # --- outer cv3 over cat(z, y2): one full-K dot ----------------------------
    out = silu(mm(w3_ref, jnp.concatenate([z, y2], axis=0)) + b3_ref[...])
    o_ref[...] = out.astype(o_ref.dtype)


# ----------------------------- kernel wrapper --------------------------------

_WEIGHT_NAMES = ("w12", "b12", "ws12", "bs12", "wb1", "bb1", "wb2", "bb2",
                 "ws3", "bs3", "w3", "b3")


def dscfem_forward(x_nchw, kp):
    n, c1, H, W = x_nchw.shape
    hw = H * W                                        # lane-dense when hw % 128 == 0
    c_ = kp["ws3"].shape[0]
    c2 = kp["w3"].shape[0]
    x2 = x_nchw.reshape(n, c1, hw)                    # metadata-only reshape

    # Host-side zero-padding masks for the 9 taps (keeps cmp/div off the VPU).
    lane = jnp.arange(hw, dtype=jnp.int32)
    hh, ww = lane // W, lane % W
    rows = []
    for dy in (-1, 0, 1):
        for dx in (-1, 0, 1):
            rows.append((hh + dy >= 0) & (hh + dy < H) &
                        (ww + dx >= 0) & (ww + dx < W))
    masks = jnp.stack(rows, axis=0).astype(jnp.float32)      # (9, hw)

    weights = [kp[name] for name in _WEIGHT_NAMES]

    def wspec(arr):
        nd = arr.ndim
        return pl.BlockSpec(arr.shape, lambda b, _nd=nd: (0,) * _nd)

    # Explicit scoped-VMEM budget (live acts + double-buffered I/O + weights),
    # clamped to 64 MiB so it is safe on v7x and below physical on v5e/v6e.
    f32b = 4
    live_rows = c1 + 2 * (2 * c_) + 3 * c_ + 9 * c_ + c2 + 9
    act_bytes = live_rows * hw * f32b
    io_bytes = 2 * (c1 + c2) * hw * f32b
    w_bytes = sum(int(a.size) * a.dtype.itemsize for a in weights)
    vmem_limit = int(min(max(2 * (act_bytes + io_bytes + w_bytes),
                             32 * 1024 * 1024),
                         64 * 1024 * 1024))

    matmul_flops = 2 * hw * n * ((2 * c_) * c1 +        # cv1 + cv2
                                 (2 * c_) * c_ +        # s_cv1 + s_cv2
                                 2 * c_ * (9 * c_) +    # two 3x3 convs
                                 c_ * (2 * c_) +        # s_cv3
                                 c2 * (2 * c_))         # cv3
    transcendentals = hw * n * (7 * c_ + c2)            # one sigmoid per SiLU elem
    bytes_accessed = (int(x2.size) * f32b + n * c2 * hw * f32b +
                      int(masks.size) * f32b + w_bytes)

    out = pl.pallas_call(
        functools.partial(_dscfem_kernel, H=H, W=W, c_=c_),
        out_shape=jax.ShapeDtypeStruct((n, c2, hw), jnp.float32),
        grid_spec=pltpu.PrefetchScalarGridSpec(
            num_scalar_prefetch=0,
            grid=(n,),
            in_specs=[pl.BlockSpec((None, c1, hw), lambda b: (b, 0, 0)),
                      pl.BlockSpec((9, hw), lambda b: (0, 0))]
                     + [wspec(a) for a in weights],
            out_specs=pl.BlockSpec((None, c2, hw), lambda b: (b, 0, 0))),
        compiler_params=pltpu.CompilerParams(
            dimension_semantics=("parallel",),
            vmem_limit_bytes=vmem_limit),
        cost_estimate=pl.CostEstimate(
            flops=matmul_flops, transcendentals=transcendentals,
            bytes_accessed=bytes_accessed),
    )(x2, masks, *weights)
    return out.reshape(n, c2, H, W)


# --------------------------- parameters (folded BN) ---------------------------

def _fold_bn(w, gamma, beta, mean, var, eps=1e-3):
    # w: PyTorch layout (cout, cin, kh, kw); fold BN into conv weight/bias.
    s = gamma / jnp.sqrt(var + eps)
    wf = w * s[:, None, None, None]
    bf = beta - mean * s
    return wf.astype(jnp.float32), bf.astype(jnp.float32)


def _make_conv(key, cin, cout, k):
    ks = jax.random.split(key, 5)
    w = 0.2 * jax.random.normal(ks[0], (cout, cin, k, k), jnp.float32)
    gamma = 1.0 + 0.1 * jax.random.normal(ks[1], (cout,), jnp.float32)
    beta = 0.1 * jax.random.normal(ks[2], (cout,), jnp.float32)
    mean = 0.1 * jax.random.normal(ks[3], (cout,), jnp.float32)
    var = 0.5 + jnp.abs(jax.random.normal(ks[4], (cout,), jnp.float32))
    return _fold_bn(w, gamma, beta, mean, var)


def init_dscfem_params(key, c1, c2, e=0.5):
    c_ = int(c2 * e)
    specs = {
        "cv1": (c1, c_, 1), "cv2": (c1, c_, 1), "cv3": (2 * c_, c2, 1),
        "cv4": (c1, c_, 1),          # present in __init__, unused in forward
        "s_cv1": (c_, c_, 1), "s_cv2": (c_, c_, 1), "s_cv3": (2 * c_, c_, 1),
        "b_cv1": (c_, c_, 3), "b_cv2": (c_, c_, 3),
    }
    keys = jax.random.split(key, len(specs))
    return {name: _make_conv(k, *spec)
            for k, (name, spec) in zip(keys, specs.items())}


def pack_kernel_params(params):
    """Repack folded OIHW weights into the (cout, cin)-style kernel layout:
    merge shared-input 1x1s, flatten 3x3s to (cout, 9*cin) tap-major, and
    pre-cast all matmul weights to bf16 (biases stay f32)."""
    bf16 = jnp.bfloat16

    def w1x1(name):
        w, b = params[name]
        return w.reshape(w.shape[0], w.shape[1]), b.reshape(-1, 1)

    def w3x3(name):
        w, b = params[name]
        cout, cin, kh, kw = w.shape
        # (cout, ky, kx, cin) -> (cout, 9*cin); column k*cin+ci matches the
        # stacked-tap sublane order k*c_+ci with k = ky*3 + kx (cross-corr).
        wt = jnp.transpose(w, (0, 2, 3, 1)).reshape(cout, kh * kw * cin)
        return wt, b.reshape(-1, 1)

    kp = {}
    w_a, b_a = w1x1("cv1"); w_b, b_b = w1x1("cv2")
    kp["w12"] = jnp.concatenate([w_a, w_b], axis=0).astype(bf16)
    kp["b12"] = jnp.concatenate([b_a, b_b], axis=0)

    w_a, b_a = w1x1("s_cv1"); w_b, b_b = w1x1("s_cv2")
    kp["ws12"] = jnp.concatenate([w_a, w_b], axis=0).astype(bf16)
    kp["bs12"] = jnp.concatenate([b_a, b_b], axis=0)

    wb1, bb1 = w3x3("b_cv1"); kp["wb1"], kp["bb1"] = wb1.astype(bf16), bb1
    wb2, bb2 = w3x3("b_cv2"); kp["wb2"], kp["bb2"] = wb2.astype(bf16), bb2

    ws3, bs3 = w1x1("s_cv3")                 # (c_, 2c_), input order [u | b]
    kp["ws3"], kp["bs3"] = ws3.astype(bf16), bs3
    w3, b3 = w1x1("cv3")                     # (c2, 2c_), input order [z | y2]
    kp["w3"], kp["b3"] = w3.astype(bf16), b3
    return kp


# ----------------------------- pure-JAX reference -----------------------------

def _ref_conv(x, w, b, pad):
    y = jax.lax.conv_general_dilated(
        x, w, window_strides=(1, 1), padding=pad,
        dimension_numbers=("NCHW", "OIHW", "NCHW"))
    y = y + b[None, :, None, None]
    return y * jax.nn.sigmoid(y)


def dscfem_ref(x, params):
    p1 = ((0, 0), (0, 0))
    p3 = ((1, 1), (1, 1))
    y1 = _ref_conv(x, *params["cv1"], p1)
    y2 = _ref_conv(x, *params["cv2"], p1)
    a = _ref_conv(y1, *params["s_cv1"], p1)
    b = _ref_conv(y1, *params["s_cv2"], p1)
    t = _ref_conv(a, *params["b_cv1"], p3)
    u = a + _ref_conv(t, *params["b_cv2"], p3)
    z = _ref_conv(jnp.concatenate([u, b], axis=1), *params["s_cv3"], p1)
    out = _ref_conv(jnp.concatenate([z, y2], axis=1), *params["cv3"], p1)
    return out


# ------------------------------------ main ------------------------------------

if __name__ == "__main__":
    key = jax.random.PRNGKey(0)
    kx, kparam = jax.random.split(key)

    batch, c1, c2, H, W = 2, 4, 8, 16, 16
    x = jax.random.normal(kx, (batch, c1, H, W), jnp.float32)
    params = init_dscfem_params(kparam, c1, c2)
    kp = pack_kernel_params(params)

    fwd = jax.jit(dscfem_forward)
    out = jax.block_until_ready(fwd(x, kp))
    assert out.shape == (batch, c2, H, W), out.shape

    ref = jax.block_until_ready(dscfem_ref(x, params))
    err = float(jnp.max(jnp.abs(out - ref)))
    # bf16 matmul operands (f32 accumulation): tolerance relaxed from the f32 2e-2.
    assert err < 5e-2, f"max abs err {err}"

    print("KERNEL_OK")
</pallas_src>

<mosaic_0001>
module attributes {stable_mosaic.version = 11 : i64} {
  func.func @_dscfem_kernel(%arg0: i32, %arg1: memref<1x4x256xf32, #tpu.memory_space<vmem>>, %arg2: memref<9x256xf32, #tpu.memory_space<vmem>>, %arg3: memref<8x4xbf16, #tpu.memory_space<vmem>>, %arg4: memref<8x1xf32, #tpu.memory_space<vmem>>, %arg5: memref<8x4xbf16, #tpu.memory_space<vmem>>, %arg6: memref<8x1xf32, #tpu.memory_space<vmem>>, %arg7: memref<4x36xbf16, #tpu.memory_space<vmem>>, %arg8: memref<4x1xf32, #tpu.memory_space<vmem>>, %arg9: memref<4x36xbf16, #tpu.memory_space<vmem>>, %arg10: memref<4x1xf32, #tpu.memory_space<vmem>>, %arg11: memref<4x8xbf16, #tpu.memory_space<vmem>>, %arg12: memref<4x1xf32, #tpu.memory_space<vmem>>, %arg13: memref<8x8xbf16, #tpu.memory_space<vmem>>, %arg14: memref<8x1xf32, #tpu.memory_space<vmem>>, %arg15: memref<1x8x256xf32, #tpu.memory_space<vmem>>) attributes {dimension_semantics = [#tpu.dimension_semantics<parallel>], iteration_bounds = array<i64: 2>, scalar_prefetch = 0 : i64, scratch_operands = 0 : i64, tpu.core_type = #tpu.core_type<tc>, window_params = [{transform_indices = @transform_0, window_bounds = array<i64: 1, 4, 256>}, {pipeline_mode = #tpu.pipeline_mode<synchronous>, transform_indices = @transform_1, window_bounds = array<i64: 9, 256>}, {pipeline_mode = #tpu.pipeline_mode<synchronous>, transform_indices = @transform_2, window_bounds = array<i64: 8, 4>}, {pipeline_mode = #tpu.pipeline_mode<synchronous>, transform_indices = @transform_3, window_bounds = array<i64: 8, 1>}, {pipeline_mode = #tpu.pipeline_mode<synchronous>, transform_indices = @transform_4, window_bounds = array<i64: 8, 4>}, {pipeline_mode = #tpu.pipeline_mode<synchronous>, transform_indices = @transform_5, window_bounds = array<i64: 8, 1>}, {pipeline_mode = #tpu.pipeline_mode<synchronous>, transform_indices = @transform_6, window_bounds = array<i64: 4, 36>}, {pipeline_mode = #tpu.pipeline_mode<synchronous>, transform_indices = @transform_7, window_bounds = array<i64: 4, 1>}, {pipeline_mode = #tpu.pipeline_mode<synchronous>, transform_indices = @transform_8, window_bounds = array<i64: 4, 36>}, {pipeline_mode = #tpu.pipeline_mode<synchronous>, transform_indices = @transform_9, window_bounds = array<i64: 4, 1>}, {pipeline_mode = #tpu.pipeline_mode<synchronous>, transform_indices = @transform_10, window_bounds = array<i64: 4, 8>}, {pipeline_mode = #tpu.pipeline_mode<synchronous>, transform_indices = @transform_11, window_bounds = array<i64: 4, 1>}, {pipeline_mode = #tpu.pipeline_mode<synchronous>, transform_indices = @transform_12, window_bounds = array<i64: 8, 8>}, {pipeline_mode = #tpu.pipeline_mode<synchronous>, transform_indices = @transform_13, window_bounds = array<i64: 8, 1>}, {transform_indices = @transform_14, window_bounds = array<i64: 1, 8, 256>}]} {
    %c0 = arith.constant 0 : index
    %c0_0 = arith.constant 0 : index
    %c0_1 = arith.constant 0 : index
    %0 = vector.load %arg1[%c0, %c0_0, %c0_1] : memref<1x4x256xf32, #tpu.memory_space<vmem>>, vector<1x4x256xf32>
    %1 = vector.shape_cast %0 : vector<1x4x256xf32> to vector<4x256xf32>
    %c0_2 = arith.constant 0 : index
    %c0_3 = arith.constant 0 : index
    %2 = vector.load %arg2[%c0_2, %c0_3] : memref<9x256xf32, #tpu.memory_space<vmem>>, vector<9x256xf32>
    %c0_4 = arith.constant 0 : index
    %c0_5 = arith.constant 0 : index
    %3 = vector.load %arg3[%c0_4, %c0_5] : memref<8x4xbf16, #tpu.memory_space<vmem>>, vector<8x4xbf16>
    %4 = arith.truncf %1 : vector<4x256xf32> to vector<4x256xbf16>
    %cst = arith.constant dense<0.000000e+00> : vector<8x256xf32>
    %5 = tpu.matmul %3, %4, %cst {dimension_numbers = #tpu.dot_dimension_numbers<[1], [0], [0], [1], [0, 0, 1, 1], [], []>} : vector<8x4xbf16>, vector<4x256xbf16>, vector<8x256xf32> -> vector<8x256xf32>
    %c0_6 = arith.constant 0 : index
    %c0_7 = arith.constant 0 : index
    %6 = vector.load %arg4[%c0_6, %c0_7] : memref<8x1xf32, #tpu.memory_space<vmem>>, vector<8x1xf32>
    %7 = vector.broadcast %6 : vector<8x1xf32> to vector<8x256xf32>
    %8 = arith.addf %5, %7 : vector<8x256xf32>
    %9 = arith.negf %8 : vector<8x256xf32>
    %10 = math.exp %9 : vector<8x256xf32>
    %cst_8 = arith.constant 1.000000e+00 : f32
    %11 = vector.broadcast %cst_8 : f32 to vector<8x256xf32>
    %12 = arith.addf %11, %10 : vector<8x256xf32>
    %13 = arith.divf %11, %12 : vector<8x256xf32>
    %14 = arith.mulf %8, %13 : vector<8x256xf32>
    %15 = vector.extract_strided_slice %14 {offsets = [0, 0], sizes = [4, 256], strides = [1, 1]} : vector<8x256xf32> to vector<4x256xf32>
    %16 = vector.extract_strided_slice %14 {offsets = [4, 0], sizes = [4, 256], strides = [1, 1]} : vector<8x256xf32> to vector<4x256xf32>
    %c0_9 = arith.constant 0 : index
    %c0_10 = arith.constant 0 : index
    %17 = vector.load %arg5[%c0_9, %c0_10] : memref<8x4xbf16, #tpu.memory_space<vmem>>, vector<8x4xbf16>
    %18 = arith.truncf %15 : vector<4x256xf32> to vector<4x256xbf16>
    %cst_11 = arith.constant dense<0.000000e+00> : vector<8x256xf32>
    %19 = tpu.matmul %17, %18, %cst_11 {dimension_numbers = #tpu.dot_dimension_numbers<[1], [0], [0], [1], [0, 0, 1, 1], [], []>} : vector<8x4xbf16>, vector<4x256xbf16>, vector<8x256xf32> -> vector<8x256xf32>
    %c0_12 = arith.constant 0 : index
    %c0_13 = arith.constant 0 : index
    %20 = vector.load %arg6[%c0_12, %c0_13] : memref<8x1xf32, #tpu.memory_space<vmem>>, vector<8x1xf32>
    %21 = vector.broadcast %20 : vector<8x1xf32> to vector<8x256xf32>
    %22 = arith.addf %19, %21 : vector<8x256xf32>
    %23 = arith.negf %22 : vector<8x256xf32>
    %24 = math.exp %23 : vector<8x256xf32>
    %cst_14 = arith.constant 1.000000e+00 : f32
    %25 = vector.broadcast %cst_14 : f32 to vector<8x256xf32>
    %26 = arith.addf %25, %24 : vector<8x256xf32>
    %27 = arith.divf %25, %26 : vector<8x256xf32>
    %28 = arith.mulf %22, %27 : vector<8x256xf32>
    %29 = vector.extract_strided_slice %28 {offsets = [0, 0], sizes = [4, 256], strides = [1, 1]} : vector<8x256xf32> to vector<4x256xf32>
    %30 = vector.extract_strided_slice %28 {offsets = [4, 0], sizes = [4, 256], strides = [1, 1]} : vector<8x256xf32> to vector<4x256xf32>
    %c17_i32 = arith.constant 17 : i32
    %31 = tpu.dynamic_rotate %29 by %c17_i32 dim 1 : vector<4x256xf32>, i32 -> vector<4x256xf32>
    %32 = vector.extract_strided_slice %2 {offsets = [0, 0], sizes = [1, 256], strides = [1, 1]} : vector<9x256xf32> to vector<1x256xf32>
    %33 = vector.broadcast %32 : vector<1x256xf32> to vector<4x256xf32>
    %34 = arith.mulf %31, %33 : vector<4x256xf32>
    %c16_i32 = arith.constant 16 : i32
    %35 = tpu.dynamic_rotate %29 by %c16_i32 dim 1 : vector<4x256xf32>, i32 -> vector<4x256xf32>
    %36 = vector.extract_strided_slice %2 {offsets = [1, 0], sizes = [1, 256], strides = [1, 1]} : vector<9x256xf32> to vector<1x256xf32>
    %37 = vector.broadcast %36 : vector<1x256xf32> to vector<4x256xf32>
    %38 = arith.mulf %35, %37 : vector<4x256xf32>
    %c15_i32 = arith.constant 15 : i32
    %39 = tpu.dynamic_rotate %29 by %c15_i32 dim 1 : vector<4x256xf32>, i32 -> vector<4x256xf32>
    %40 = vector.extract_strided_slice %2 {offsets = [2, 0], sizes = [1, 256], strides = [1, 1]} : vector<9x256xf32> to vector<1x256xf32>
    %41 = vector.broadcast %40 : vector<1x256xf32> to vector<4x256xf32>
    %42 = arith.mulf %39, %41 : vector<4x256xf32>
    %c1_i32 = arith.constant 1 : i32
    %43 = tpu.dynamic_rotate %29 by %c1_i32 dim 1 : vector<4x256xf32>, i32 -> vector<4x256xf32>
    %44 = vector.extract_strided_slice %2 {offsets = [3, 0], sizes = [1, 256], strides = [1, 1]} : vector<9x256xf32> to vector<1x256xf32>
    %45 = vector.broadcast %44 : vector<1x256xf32> to vector<4x256xf32>
    %46 = arith.mulf %43, %45 : vector<4x256xf32>
    %c255_i32 = arith.constant 255 : i32
    %47 = tpu.dynamic_rotate %29 by %c255_i32 dim 1 : vector<4x256xf32>, i32 -> vector<4x256xf32>
    %48 = vector.extract_strided_slice %2 {offsets = [5, 0], sizes = [1, 256], strides = [1, 1]} : vector<9x256xf32> to vector<1x256xf32>
    %49 = vector.broadcast %48 : vector<1x256xf32> to vector<4x256xf32>
    %50 = arith.mulf %47, %49 : vector<4x256xf32>
    %c241_i32 = arith.constant 241 : i32
    %51 = tpu.dynamic_rotate %29 by %c241_i32 dim 1 : vector<4x256xf32>, i32 -> vector<4x256xf32>
    %52 = vector.extract_strided_slice %2 {offsets = [6, 0], sizes = [1, 256], strides = [1, 1]} : vector<9x256xf32> to vector<1x256xf32>
    %53 = vector.broadcast %52 : vector<1x256xf32> to vector<4x256xf32>
    %54 = arith.mulf %51, %53 : vector<4x256xf32>
    %c240_i32 = arith.constant 240 : i32
    %55 = tpu.dynamic_rotate %29 by %c240_i32 dim 1 : vector<4x256xf32>, i32 -> vector<4x256xf32>
    %56 = vector.extract_strided_slice %2 {offsets = [7, 0], sizes = [1, 256], strides = [1, 1]} : vector<9x256xf32> to vector<1x256xf32>
    %57 = vector.broadcast %56 : vector<1x256xf32> to vector<4x256xf32>
    %58 = arith.mulf %55, %57 : vector<4x256xf32>
    %c239_i32 = arith.constant 239 : i32
    %59 = tpu.dynamic_rotate %29 by %c239_i32 dim 1 : vector<4x256xf32>, i32 -> vector<4x256xf32>
    %60 = vector.extract_strided_slice %2 {offsets = [8, 0], sizes = [1, 256], strides = [1, 1]} : vector<9x256xf32> to vector<1x256xf32>
    %61 = vector.broadcast %60 : vector<1x256xf32> to vector<4x256xf32>
    %62 = arith.mulf %59, %61 : vector<4x256xf32>
    %63 = tpu.concatenate %34, %38, %42, %46, %29, %50, %54, %58, %62 in 0 : vector<4x256xf32>, vector<4x256xf32>, vector<4x256xf32>, vector<4x256xf32>, vector<4x256xf32>, vector<4x256xf32>, vector<4x256xf32>, vector<4x256xf32>, vector<4x256xf32> -> vector<36x256xf32>
    %c0_15 = arith.constant 0 : index
    %c0_16 = arith.constant 0 : index
    %64 = vector.load %arg7[%c0_15, %c0_16] : memref<4x36xbf16, #tpu.memory_space<vmem>>, vector<4x36xbf16>
    %65 = arith.truncf %63 : vector<36x256xf32> to vector<36x256xbf16>
    %cst_17 = arith.constant dense<0.000000e+00> : vector<4x256xf32>
    %66 = tpu.matmul %64, %65, %cst_17 {dimension_numbers = #tpu.dot_dimension_numbers<[1], [0], [0], [1], [0, 0, 1, 1], [], []>} : vector<4x36xbf16>, vector<36x256xbf16>, vector<4x256xf32> -> vector<4x256xf32>
    %c0_18 = arith.constant 0 : index
    %c0_19 = arith.constant 0 : index
    %67 = vector.load %arg8[%c0_18, %c0_19] : memref<4x1xf32, #tpu.memory_space<vmem>>, vector<4x1xf32>
    %68 = vector.broadcast %67 : vector<4x1xf32> to vector<4x256xf32>
    %69 = arith.addf %66, %68 : vector<4x256xf32>
    %70 = arith.negf %69 : vector<4x256xf32>
    %71 = math.exp %70 : vector<4x256xf32>
    %cst_20 = arith.constant 1.000000e+00 : f32
    %72 = vector.broadcast %cst_20 : f32 to vector<4x256xf32>
    %73 = arith.addf %72, %71 : vector<4x256xf32>
    %74 = arith.divf %72, %73 : vector<4x256xf32>
    %75 = arith.mulf %69, %74 : vector<4x256xf32>
    %c17_i32_21 = arith.constant 17 : i32
    %76 = tpu.dynamic_rotate %75 by %c17_i32_21 dim 1 : vector<4x256xf32>, i32 -> vector<4x256xf32>
    %77 = vector.extract_strided_slice %2 {offsets = [0, 0], sizes = [1, 256], strides = [1, 1]} : vector<9x256xf32> to vector<1x256xf32>
    %78 = vector.broadcast %77 : vector<1x256xf32> to vector<4x256xf32>
    %79 = arith.mulf %76, %78 : vector<4x256xf32>
    %c16_i32_22 = arith.constant 16 : i32
    %80 = tpu.dynamic_rotate %75 by %c16_i32_22 dim 1 : vector<4x256xf32>, i32 -> vector<4x256xf32>
    %81 = vector.extract_strided_slice %2 {offsets = [1, 0], sizes = [1, 256], strides = [1, 1]} : vector<9x256xf32> to vector<1x256xf32>
    %82 = vector.broadcast %81 : vector<1x256xf32> to vector<4x256xf32>
    %83 = arith.mulf %80, %82 : vector<4x256xf32>
    %c15_i32_23 = arith.constant 15 : i32
    %84 = tpu.dynamic_rotate %75 by %c15_i32_23 dim 1 : vector<4x256xf32>, i32 -> vector<4x256xf32>
    %85 = vector.extract_strided_slice %2 {offsets = [2, 0], sizes = [1, 256], strides = [1, 1]} : vector<9x256xf32> to vector<1x256xf32>
    %86 = vector.broadcast %85 : vector<1x256xf32> to vector<4x256xf32>
    %87 = arith.mulf %84, %86 : vector<4x256xf32>
    %c1_i32_24 = arith.constant 1 : i32
    %88 = tpu.dynamic_rotate %75 by %c1_i32_24 dim 1 : vector<4x256xf32>, i32 -> vector<4x256xf32>
    %89 = vector.extract_strided_slice %2 {offsets = [3, 0], sizes = [1, 256], strides = [1, 1]} : vector<9x256xf32> to vector<1x256xf32>
    %90 = vector.broadcast %89 : vector<1x256xf32> to vector<4x256xf32>
    %91 = arith.mulf %88, %90 : vector<4x256xf32>
    %c255_i32_25 = arith.constant 255 : i32
    %92 = tpu.dynamic_rotate %75 by %c255_i32_25 dim 1 : vector<4x256xf32>, i32 -> vector<4x256xf32>
    %93 = vector.extract_strided_slice %2 {offsets = [5, 0], sizes = [1, 256], strides = [1, 1]} : vector<9x256xf32> to vector<1x256xf32>
    %94 = vector.broadcast %93 : vector<1x256xf32> to vector<4x256xf32>
    %95 = arith.mulf %92, %94 : vector<4x256xf32>
    %c241_i32_26 = arith.constant 241 : i32
    %96 = tpu.dynamic_rotate %75 by %c241_i32_26 dim 1 : vector<4x256xf32>, i32 -> vector<4x256xf32>
    %97 = vector.extract_strided_slice %2 {offsets = [6, 0], sizes = [1, 256], strides = [1, 1]} : vector<9x256xf32> to vector<1x256xf32>
    %98 = vector.broadcast %97 : vector<1x256xf32> to vector<4x256xf32>
    %99 = arith.mulf %96, %98 : vector<4x256xf32>
    %c240_i32_27 = arith.constant 240 : i32
    %100 = tpu.dynamic_rotate %75 by %c240_i32_27 dim 1 : vector<4x256xf32>, i32 -> vector<4x256xf32>
    %101 = vector.extract_strided_slice %2 {offsets = [7, 0], sizes = [1, 256], strides = [1, 1]} : vector<9x256xf32> to vector<1x256xf32>
    %102 = vector.broadcast %101 : vector<1x256xf32> to vector<4x256xf32>
    %103 = arith.mulf %100, %102 : vector<4x256xf32>
    %c239_i32_28 = arith.constant 239 : i32
    %104 = tpu.dynamic_rotate %75 by %c239_i32_28 dim 1 : vector<4x256xf32>, i32 -> vector<4x256xf32>
    %105 = vector.extract_strided_slice %2 {offsets = [8, 0], sizes = [1, 256], strides = [1, 1]} : vector<9x256xf32> to vector<1x256xf32>
    %106 = vector.broadcast %105 : vector<1x256xf32> to vector<4x256xf32>
    %107 = arith.mulf %104, %106 : vector<4x256xf32>
    %108 = tpu.concatenate %79, %83, %87, %91, %75, %95, %99, %103, %107 in 0 : vector<4x256xf32>, vector<4x256xf32>, vector<4x256xf32>, vector<4x256xf32>, vector<4x256xf32>, vector<4x256xf32>, vector<4x256xf32>, vector<4x256xf32>, vector<4x256xf32> -> vector<36x256xf32>
    %c0_29 = arith.constant 0 : index
    %c0_30 = arith.constant 0 : index
    %109 = vector.load %arg9[%c0_29, %c0_30] : memref<4x36xbf16, #tpu.memory_space<vmem>>, vector<4x36xbf16>
    %110 = arith.truncf %108 : vector<36x256xf32> to vector<36x256xbf16>
    %cst_31 = arith.constant dense<0.000000e+00> : vector<4x256xf32>
    %111 = tpu.matmul %109, %110, %cst_31 {dimension_numbers = #tpu.dot_dimension_numbers<[1], [0], [0], [1], [0, 0, 1, 1], [], []>} : vector<4x36xbf16>, vector<36x256xbf16>, vector<4x256xf32> -> vector<4x256xf32>
    %c0_32 = arith.constant 0 : index
    %c0_33 = arith.constant 0 : index
    %112 = vector.load %arg10[%c0_32, %c0_33] : memref<4x1xf32, #tpu.memory_space<vmem>>, vector<4x1xf32>
    %113 = vector.broadcast %112 : vector<4x1xf32> to vector<4x256xf32>
    %114 = arith.addf %111, %113 : vector<4x256xf32>
    %115 = arith.negf %114 : vector<4x256xf32>
    %116 = math.exp %115 : vector<4x256xf32>
    %cst_34 = arith.constant 1.000000e+00 : f32
    %117 = vector.broadcast %cst_34 : f32 to vector<4x256xf32>
    %118 = arith.addf %117, %116 : vector<4x256xf32>
    %119 = arith.divf %117, %118 : vector<4x256xf32>
    %120 = arith.mulf %114, %119 : vector<4x256xf32>
    %121 = arith.addf %29, %120 : vector<4x256xf32>
    %122 = tpu.concatenate %121, %30 in 0 : vector<4x256xf32>, vector<4x256xf32> -> vector<8x256xf32>
    %c0_35 = arith.constant 0 : index
    %c0_36 = arith.constant 0 : index
    %123 = vector.load %arg11[%c0_35, %c0_36] : memref<4x8xbf16, #tpu.memory_space<vmem>>, vector<4x8xbf16>
    %124 = arith.truncf %122 : vector<8x256xf32> to vector<8x256xbf16>
    %cst_37 = arith.constant dense<0.000000e+00> : vector<4x256xf32>
    %125 = tpu.matmul %123, %124, %cst_37 {dimension_numbers = #tpu.dot_dimension_numbers<[1], [0], [0], [1], [0, 0, 1, 1], [], []>} : vector<4x8xbf16>, vector<8x256xbf16>, vector<4x256xf32> -> vector<4x256xf32>
    %c0_38 = arith.constant 0 : index
    %c0_39 = arith.constant 0 : index
    %126 = vector.load %arg12[%c0_38, %c0_39] : memref<4x1xf32, #tpu.memory_space<vmem>>, vector<4x1xf32>
    %127 = vector.broadcast %126 : vector<4x1xf32> to vector<4x256xf32>
    %128 = arith.addf %125, %127 : vector<4x256xf32>
    %129 = arith.negf %128 : vector<4x256xf32>
    %130 = math.exp %129 : vector<4x256xf32>
    %cst_40 = arith.constant 1.000000e+00 : f32
    %131 = vector.broadcast %cst_40 : f32 to vector<4x256xf32>
    %132 = arith.addf %131, %130 : vector<4x256xf32>
    %133 = arith.divf %131, %132 : vector<4x256xf32>
    %134 = arith.mulf %128, %133 : vector<4x256xf32>
    %135 = tpu.concatenate %134, %16 in 0 : vector<4x256xf32>, vector<4x256xf32> -> vector<8x256xf32>
    %c0_41 = arith.constant 0 : index
    %c0_42 = arith.constant 0 : index
    %136 = vector.load %arg13[%c0_41, %c0_42] : memref<8x8xbf16, #tpu.memory_space<vmem>>, vector<8x8xbf16>
    %137 = arith.truncf %135 : vector<8x256xf32> to vector<8x256xbf16>
    %cst_43 = arith.constant dense<0.000000e+00> : vector<8x256xf32>
    %138 = tpu.matmul %136, %137, %cst_43 {dimension_numbers = #tpu.dot_dimension_numbers<[1], [0], [0], [1], [0, 0, 1, 1], [], []>} : vector<8x8xbf16>, vector<8x256xbf16>, vector<8x256xf32> -> vector<8x256xf32>
    %c0_44 = arith.constant 0 : index
    %c0_45 = arith.constant 0 : index
    %139 = vector.load %arg14[%c0_44, %c0_45] : memref<8x1xf32, #tpu.memory_space<vmem>>, vector<8x1xf32>
    %140 = vector.broadcast %139 : vector<8x1xf32> to vector<8x256xf32>
    %141 = arith.addf %138, %140 : vector<8x256xf32>
    %142 = arith.negf %141 : vector<8x256xf32>
    %143 = math.exp %142 : vector<8x256xf32>
    %cst_46 = arith.constant 1.000000e+00 : f32
    %144 = vector.broadcast %cst_46 : f32 to vector<8x256xf32>
    %145 = arith.addf %144, %143 : vector<8x256xf32>
    %146 = arith.divf %144, %145 : vector<8x256xf32>
    %147 = arith.mulf %141, %146 : vector<8x256xf32>
    %c0_47 = arith.constant 0 : index
    %c0_48 = arith.constant 0 : index
    %c0_49 = arith.constant 0 : index
    %148 = vector.load %arg15[%c0_47, %c0_48, %c0_49] : memref<1x8x256xf32, #tpu.memory_space<vmem>>, vector<1x8x256xf32>
    %149 = vector.shape_cast %148 : vector<1x8x256xf32> to vector<8x256xf32>
    %150 = vector.shape_cast %147 : vector<8x256xf32> to vector<1x8x256xf32>
    tpu.vector_store %arg15[%c0_47, %c0_48, %c0_49], %150 {strides = array<i32>} : memref<1x8x256xf32, #tpu.memory_space<vmem>>, vector<1x8x256xf32>,
    return
  }
  func.func @transform_0(%arg0: i32) -> (i32, i32, i32) {
    %c0_i32 = arith.constant 0 : i32
    %c0_i32_0 = arith.constant 0 : i32
    %c0_i32_1 = arith.constant 0 : i32
    return %arg0, %c0_i32, %c0_i32_0 : i32, i32, i32
  }
  func.func @transform_1(%arg0: i32) -> (i32, i32) {
    %c0_i32 = arith.constant 0 : i32
    %c0_i32_0 = arith.constant 0 : i32
    %c0_i32_1 = arith.constant 0 : i32
    return %c0_i32, %c0_i32_0 : i32, i32
  }
  func.func @transform_2(%arg0: i32) -> (i32, i32) {
    %c0_i32 = arith.constant 0 : i32
    %c0_i32_0 = arith.constant 0 : i32
    %c0_i32_1 = arith.constant 0 : i32
    return %c0_i32, %c0_i32_0 : i32, i32
  }
  func.func @transform_3(%arg0: i32) -> (i32, i32) {
    %c0_i32 = arith.constant 0 : i32
    %c0_i32_0 = arith.constant 0 : i32
    %c0_i32_1 = arith.constant 0 : i32
    return %c0_i32, %c0_i32_0 : i32, i32
  }
  func.func @transform_4(%arg0: i32) -> (i32, i32) {
    %c0_i32 = arith.constant 0 : i32
    %c0_i32_0 = arith.constant 0 : i32
    %c0_i32_1 = arith.constant 0 : i32
    return %c0_i32, %c0_i32_0 : i32, i32
  }
  func.func @transform_5(%arg0: i32) -> (i32, i32) {
    %c0_i32 = arith.constant 0 : i32
    %c0_i32_0 = arith.constant 0 : i32
    %c0_i32_1 = arith.constant 0 : i32
    return %c0_i32, %c0_i32_0 : i32, i32
  }
  func.func @transform_6(%arg0: i32) -> (i32, i32) {
    %c0_i32 = arith.constant 0 : i32
    %c0_i32_0 = arith.constant 0 : i32
    %c0_i32_1 = arith.constant 0 : i32
    return %c0_i32, %c0_i32_0 : i32, i32
  }
  func.func @transform_7(%arg0: i32) -> (i32, i32) {
    %c0_i32 = arith.constant 0 : i32
    %c0_i32_0 = arith.constant 0 : i32
    %c0_i32_1 = arith.constant 0 : i32
    return %c0_i32, %c0_i32_0 : i32, i32
  }
  func.func @transform_8(%arg0: i32) -> (i32, i32) {
    %c0_i32 = arith.constant 0 : i32
    %c0_i32_0 = arith.constant 0 : i32
    %c0_i32_1 = arith.constant 0 : i32
    return %c0_i32, %c0_i32_0 : i32, i32
  }
  func.func @transform_9(%arg0: i32) -> (i32, i32) {
    %c0_i32 = arith.constant 0 : i32
    %c0_i32_0 = arith.constant 0 : i32
    %c0_i32_1 = arith.constant 0 : i32
    return %c0_i32, %c0_i32_0 : i32, i32
  }
  func.func @transform_10(%arg0: i32) -> (i32, i32) {
    %c0_i32 = arith.constant 0 : i32
    %c0_i32_0 = arith.constant 0 : i32
    %c0_i32_1 = arith.constant 0 : i32
    return %c0_i32, %c0_i32_0 : i32, i32
  }
  func.func @transform_11(%arg0: i32) -> (i32, i32) {
    %c0_i32 = arith.constant 0 : i32
    %c0_i32_0 = arith.constant 0 : i32
    %c0_i32_1 = arith.constant 0 : i32
    return %c0_i32, %c0_i32_0 : i32, i32
  }
  func.func @transform_12(%arg0: i32) -> (i32, i32) {
    %c0_i32 = arith.constant 0 : i32
    %c0_i32_0 = arith.constant 0 : i32
    %c0_i32_1 = arith.constant 0 : i32
    return %c0_i32, %c0_i32_0 : i32, i32
  }
  func.func @transform_13(%arg0: i32) -> (i32, i32) {
    %c0_i32 = arith.constant 0 : i32
    %c0_i32_0 = arith.constant 0 : i32
    %c0_i32_1 = arith.constant 0 : i32
    return %c0_i32, %c0_i32_0 : i32, i32
  }
  func.func @transform_14(%arg0: i32) -> (i32, i32, i32) {
    %c0_i32 = arith.constant 0 : i32
    %c0_i32_0 = arith.constant 0 : i32
    %c0_i32_1 = arith.constant 0 : i32
    return %arg0, %c0_i32, %c0_i32_0 : i32, i32, i32
  }
}

</mosaic_0001>

<llo_original>
// kernel: dscfem_forward.1
$region0: #{dscfem_forward.1}
  #allocation0 [shape = 'u32[]', space=smem, size = 0x4, offset = 0x4, fixed_abs, tag = 'smem constant byte address 0x4 - core index']
  #allocation1 [shape = 'u32[144,128]{1,0:T(1,128)}', space=vmem, size = 0x12000, scoped, tag = 'internal scratch']
  %s0 = inlined_call_operand.vmem [shape: f32[2,4,256], index: 0, kind: input, shape index: {}]
  %s1 = inlined_call_operand.vmem [shape: f32[9,256], index: 1, kind: input, shape index: {}]
  %s2 = inlined_call_operand.vmem [shape: bf16[8,4], index: 2, kind: input, shape index: {}]
  %s3 = inlined_call_operand.vmem [shape: f32[8,1], index: 3, kind: input, shape index: {}]
  %s4 = inlined_call_operand.vmem [shape: bf16[8,4], index: 4, kind: input, shape index: {}]
  %s5 = inlined_call_operand.vmem [shape: f32[8,1], index: 5, kind: input, shape index: {}]
  %s6 = inlined_call_operand.vmem [shape: bf16[4,36], index: 6, kind: input, shape index: {}]
  %s7 = inlined_call_operand.vmem [shape: f32[4,1], index: 7, kind: input, shape index: {}]
  %s8 = inlined_call_operand.vmem [shape: bf16[4,36], index: 8, kind: input, shape index: {}]
  %s9 = inlined_call_operand.vmem [shape: f32[4,1], index: 9, kind: input, shape index: {}]
  %s10 = inlined_call_operand.vmem [shape: bf16[4,8], index: 10, kind: input, shape index: {}]
  %s11 = inlined_call_operand.vmem [shape: f32[4,1], index: 11, kind: input, shape index: {}]
  %s12 = inlined_call_operand.vmem [shape: bf16[8,8], index: 12, kind: input, shape index: {}]
  %s13 = inlined_call_operand.vmem [shape: f32[8,1], index: 13, kind: input, shape index: {}]
  %s14 = inlined_call_operand.vmem [shape: f32[2,8,256], index: 14, kind: output, shape index: {}]
  %s15 = sld [smem:[#allocation0]]
  $region89: #{dscfem_forward.1} parent=0
    _
  %s17 = ssub.s32 1, %s15
  %s18 = scalar_select 0, %s17, %s15
  loop: start=0, step=1, limit=4
  $region2: #{dscfem_forward.1} parent=0 // loop_pre_header
    _
  $region3: #{dscfem_forward.1} parent=0 // loop_header
    %s20 = sphi 0, %s24
    %p21 = scmp.ge.s32.totalorder %s20, 4
    %s30 = sphi 0, %s32
    %s33 = sphi 0, %s30
    %s34 = sphi 0, %s33
    %s50 = sphi 0, %s34
    %s54 = sphi 0, %s54
    %s56 = sphi 0, %s54
    %s57 = sphi 0, %s56
    %s71 = sphi 0, %s57
    %s75 = sphi 0, %s75
    %s77 = sphi 0, %s75
    %s78 = sphi 0, %s77
    %s92 = sphi 0, %s78
    %s96 = sphi 0, %s96
    %s98 = sphi 0, %s96
    %s99 = sphi 0, %s98
    %s113 = sphi 0, %s99
    %s117 = sphi 0, %s117
    %s119 = sphi 0, %s117
    %s120 = sphi 0, %s119
    %s134 = sphi 0, %s120
    %s138 = sphi 0, %s138
    %s140 = sphi 0, %s138
    %s141 = sphi 0, %s140
    %s155 = sphi 0, %s141
    %s159 = sphi 0, %s159
    %s161 = sphi 0, %s159
    %s162 = sphi 0, %s161
    %s176 = sphi 0, %s162
    %s180 = sphi 0, %s180
    %s182 = sphi 0, %s180
    %s183 = sphi 0, %s182
    %s197 = sphi 0, %s183
    %s201 = sphi 0, %s201
    %s203 = sphi 0, %s201
    %s204 = sphi 0, %s203
    %s218 = sphi 0, %s204
    %s222 = sphi 0, %s222
    %s224 = sphi 0, %s222
    %s225 = sphi 0, %s224
    %s239 = sphi 0, %s225
    %s243 = sphi 0, %s243
    %s245 = sphi 0, %s243
    %s246 = sphi 0, %s245
    %s260 = sphi 0, %s246
    %s264 = sphi 0, %s264
    %s266 = sphi 0, %s264
    %s267 = sphi 0, %s266
    %s281 = sphi 0, %s267
    %s285 = sphi 0, %s285
    %s287 = sphi 0, %s285
    %s288 = sphi 0, %s287
    %s302 = sphi 0, %s288
    %s306 = sphi 0, %s306
    %s308 = sphi 0, %s306
    %s309 = sphi 0, %s308
    %s323 = sphi 0, %s309
    %s329 = sphi 0, %s331
    %s332 = sphi 0, %s329
    %s333 = sphi 0, %s332
    %s349 = sphi 0, %s333
  $region4: #{dscfem_forward.1} parent=0 // loop_header_branch
    %23 = sbr.rel (%p21) target = $region8
  $region5: #{dscfem_forward.1} parent=0 // loop_body
    %s25 = ssub.s32 %s20, 1
    %s26 = ssub.s32 %s20, 2
    %s27 = sadd.s32 %s20, 1
    %s28 = ssub.s32 %s20, %s27
    %p29 = scmp.eq.s32.totalorder %s28, 0
    %s31 = sadd.s32 %s30, 1
    %s32 = scalar_select %p29, %s30, %s31
    %p35 = pneg %p29
    %p36 = scmp.eq.s32.totalorder %s20, 1
    %p37 = por %p35, %p36
    %p38 = scmp.ne.s32.totalorder %s30, %s33
    %p39 = scmp.eq.s32.totalorder %s20, 0
    %p40 = por %p38, %p39
    %p41 = scmp.ne.s32.totalorder %s30, %s33
    %p42 = scmp.eq.s32.totalorder %s25, 1
    %p43 = por %p41, %p42
    %p44 = scmp.ne.s32.totalorder %s33, %s34
    %p45 = scmp.eq.s32.totalorder %s25, 0
    %p46 = por %p44, %p45
    %p47 = scmp.ne.s32.totalorder %s33, %s34
    %p48 = scmp.eq.s32.totalorder %s26, 1
    %p49 = por %p47, %p48
    %p51 = scmp.ne.s32.totalorder %s34, %s50
    %p52 = scmp.eq.s32.totalorder %s26, 0
    %p53 = por %p51, %p52
    %s55 = sadd.s32 %s54, 1
    %p58 = scmp.eq.s32.totalorder %s20, 1
    %p59 = scmp.ne.s32.totalorder %s54, %s56
    %p60 = scmp.eq.s32.totalorder %s20, 0
    %p61 = por %p59, %p60
    %p62 = scmp.ne.s32.totalorder %s54, %s56
    %p63 = scmp.eq.s32.totalorder %s25, 1
    %p64 = por %p62, %p63
    %p65 = scmp.ne.s32.totalorder %s56, %s57
    %p66 = scmp.eq.s32.totalorder %s25, 0
    %p67 = por %p65, %p66
    %p68 = scmp.ne.s32.totalorder %s56, %s57
    %p69 = scmp.eq.s32.totalorder %s26, 1
    %p70 = por %p68, %p69
    %p72 = scmp.ne.s32.totalorder %s57, %s71
    %p73 = scmp.eq.s32.totalorder %s26, 0
    %p74 = por %p72, %p73
    %s76 = sadd.s32 %s75, 1
    %p79 = scmp.eq.s32.totalorder %s20, 1
    %p80 = scmp.ne.s32.totalorder %s75, %s77
    %p81 = scmp.eq.s32.totalorder %s20, 0
    %p82 = por %p80, %p81
    %p83 = scmp.ne.s32.totalorder %s75, %s77
    %p84 = scmp.eq.s32.totalorder %s25, 1
    %p85 = por %p83, %p84
    %p86 = scmp.ne.s32.totalorder %s77, %s78
    %p87 = scmp.eq.s32.totalorder %s25, 0
    %p88 = por %p86, %p87
    %p89 = scmp.ne.s32.totalorder %s77, %s78
    %p90 = scmp.eq.s32.totalorder %s26, 1
    %p91 = por %p89, %p90
    %p93 = scmp.ne.s32.totalorder %s78, %s92
    %p94 = scmp.eq.s32.totalorder %s26, 0
    %p95 = por %p93, %p94
    %s97 = sadd.s32 %s96, 1
    %p100 = scmp.eq.s32.totalorder %s20, 1
    %p101 = scmp.ne.s32.totalorder %s96, %s98
    %p102 = scmp.eq.s32.totalorder %s20, 0
    %p103 = por %p101, %p102
    %p104 = scmp.ne.s32.totalorder %s96, %s98
    %p105 = scmp.eq.s32.totalorder %s25, 1
    %p106 = por %p104, %p105
    %p107 = scmp.ne.s32.totalorder %s98, %s99
    %p108 = scmp.eq.s32.totalorder %s25, 0
    %p109 = por %p107, %p108
    %p110 = scmp.ne.s32.totalorder %s98, %s99
    %p111 = scmp.eq.s32.totalorder %s26, 1
    %p112 = por %p110, %p111
    %p114 = scmp.ne.s32.totalorder %s99, %s113
    %p115 = scmp.eq.s32.totalorder %s26, 0
    %p116 = por %p114, %p115
    %s118 = sadd.s32 %s117, 1
    %p121 = scmp.eq.s32.totalorder %s20, 1
    %p122 = scmp.ne.s32.totalorder %s117, %s119
    %p123 = scmp.eq.s32.totalorder %s20, 0
    %p124 = por %p122, %p123
    %p125 = scmp.ne.s32.totalorder %s117, %s119
    %p126 = scmp.eq.s32.totalorder %s25, 1
    %p127 = por %p125, %p126
    %p128 = scmp.ne.s32.totalorder %s119, %s120
    %p129 = scmp.eq.s32.totalorder %s25, 0
    %p130 = por %p128, %p129
    %p131 = scmp.ne.s32.totalorder %s119, %s120
    %p132 = scmp.eq.s32.totalorder %s26, 1
    %p133 = por %p131, %p132
    %p135 = scmp.ne.s32.totalorder %s120, %s134
    %p136 = scmp.eq.s32.totalorder %s26, 0
    %p137 = por %p135, %p136
    %s139 = sadd.s32 %s138, 1
    %p142 = scmp.eq.s32.totalorder %s20, 1
    %p143 = scmp.ne.s32.totalorder %s138, %s140
    %p144 = scmp.eq.s32.totalorder %s20, 0
    %p145 = por %p143, %p144
    %p146 = scmp.ne.s32.totalorder %s138, %s140
    %p147 = scmp.eq.s32.totalorder %s25, 1
    %p148 = por %p146, %p147
    %p149 = scmp.ne.s32.totalorder %s140, %s141
    %p150 = scmp.eq.s32.totalorder %s25, 0
    %p151 = por %p149, %p150
    %p152 = scmp.ne.s32.totalorder %s140, %s141
    %p153 = scmp.eq.s32.totalorder %s26, 1
    %p154 = por %p152, %p153
    %p156 = scmp.ne.s32.totalorder %s141, %s155
    %p157 = scmp.eq.s32.totalorder %s26, 0
    %p158 = por %p156, %p157
    %s160 = sadd.s32 %s159, 1
    %p163 = scmp.eq.s32.totalorder %s20, 1
    %p164 = scmp.ne.s32.totalorder %s159, %s161
    %p165 = scmp.eq.s32.totalorder %s20, 0
    %p166 = por %p164, %p165
    %p167 = scmp.ne.s32.totalorder %s159, %s161
    %p168 = scmp.eq.s32.totalorder %s25, 1
    %p169 = por %p167, %p168
    %p170 = scmp.ne.s32.totalorder %s161, %s162
    %p171 = scmp.eq.s32.totalorder %s25, 0
    %p172 = por %p170, %p171
    %p173 = scmp.ne.s32.totalorder %s161, %s162
    %p174 = scmp.eq.s32.totalorder %s26, 1
    %p175 = por %p173, %p174
    %p177 = scmp.ne.s32.totalorder %s162, %s176
    %p178 = scmp.eq.s32.totalorder %s26, 0
    %p179 = por %p177, %p178
    %s181 = sadd.s32 %s180, 1
    %p184 = scmp.eq.s32.totalorder %s20, 1
    %p185 = scmp.ne.s32.totalorder %s180, %s182
    %p186 = scmp.eq.s32.totalorder %s20, 0
    %p187 = por %p185, %p186
    %p188 = scmp.ne.s32.totalorder %s180, %s182
    %p189 = scmp.eq.s32.totalorder %s25, 1
    %p190 = por %p188, %p189
    %p191 = scmp.ne.s32.totalorder %s182, %s183
    %p192 = scmp.eq.s32.totalorder %s25, 0
    %p193 = por %p191, %p192
    %p194 = scmp.ne.s32.totalorder %s182, %s183
    %p195 = scmp.eq.s32.totalorder %s26, 1
    %p196 = por %p194, %p195
    %p198 = scmp.ne.s32.totalorder %s183, %s197
    %p199 = scmp.eq.s32.totalorder %s26, 0
    %p200 = por %p198, %p199
    %s202 = sadd.s32 %s201, 1
    %p205 = scmp.eq.s32.totalorder %s20, 1
    %p206 = scmp.ne.s32.totalorder %s201, %s203
    %p207 = scmp.eq.s32.totalorder %s20, 0
    %p208 = por %p206, %p207
    %p209 = scmp.ne.s32.totalorder %s201, %s203
    %p210 = scmp.eq.s32.totalorder %s25, 1
    %p211 = por %p209, %p210
    %p212 = scmp.ne.s32.totalorder %s203, %s204
    %p213 = scmp.eq.s32.totalorder %s25, 0
    %p214 = por %p212, %p213
    %p215 = scmp.ne.s32.totalorder %s203, %s204
    %p216 = scmp.eq.s32.totalorder %s26, 1
    %p217 = por %p215, %p216
    %p219 = scmp.ne.s32.totalorder %s204, %s218
    %p220 = scmp.eq.s32.totalorder %s26, 0
    %p221 = por %p219, %p220
    %s223 = sadd.s32 %s222, 1
    %p226 = scmp.eq.s32.totalorder %s20, 1
    %p227 = scmp.ne.s32.totalorder %s222, %s224
    %p228 = scmp.eq.s32.totalorder %s20, 0
    %p229 = por %p227, %p228
    %p230 = scmp.ne.s32.totalorder %s222, %s224
    %p231 = scmp.eq.s32.totalorder %s25, 1
    %p232 = por %p230, %p231
    %p233 = scmp.ne.s32.totalorder %s224, %s225
    %p234 = scmp.eq.s32.totalorder %s25, 0
    %p235 = por %p233, %p234
    %p236 = scmp.ne.s32.totalorder %s224, %s225
    %p237 = scmp.eq.s32.totalorder %s26, 1
    %p238 = por %p236, %p237
    %p240 = scmp.ne.s32.totalorder %s225, %s239
    %p241 = scmp.eq.s32.totalorder %s26, 0
    %p242 = por %p240, %p241
    %s244 = sadd.s32 %s243, 1
    %p247 = scmp.eq.s32.totalorder %s20, 1
    %p248 = scmp.ne.s32.totalorder %s243, %s245
    %p249 = scmp.eq.s32.totalorder %s20, 0
    %p250 = por %p248, %p249
    %p251 = scmp.ne.s32.totalorder %s243, %s245
    %p252 = scmp.eq.s32.totalorder %s25, 1
    %p253 = por %p251, %p252
    %p254 = scmp.ne.s32.totalorder %s245, %s246
    %p255 = scmp.eq.s32.totalorder %s25, 0
    %p256 = por %p254, %p255
    %p257 = scmp.ne.s32.totalorder %s245, %s246
    %p258 = scmp.eq.s32.totalorder %s26, 1
    %p259 = por %p257, %p258
    %p261 = scmp.ne.s32.totalorder %s246, %s260
    %p262 = scmp.eq.s32.totalorder %s26, 0
    %p263 = por %p261, %p262
    %s265 = sadd.s32 %s264, 1
    %p268 = scmp.eq.s32.totalorder %s20, 1
    %p269 = scmp.ne.s32.totalorder %s264, %s266
    %p270 = scmp.eq.s32.totalorder %s20, 0
    %p271 = por %p269, %p270
    %p272 = scmp.ne.s32.totalorder %s264, %s266
    %p273 = scmp.eq.s32.totalorder %s25, 1
    %p274 = por %p272, %p273
    %p275 = scmp.ne.s32.totalorder %s266, %s267
    %p276 = scmp.eq.s32.totalorder %s25, 0
    %p277 = por %p275, %p276
    %p278 = scmp.ne.s32.totalorder %s266, %s267
    %p279 = scmp.eq.s32.totalorder %s26, 1
    %p280 = por %p278, %p279
    %p282 = scmp.ne.s32.totalorder %s267, %s281
    %p283 = scmp.eq.s32.totalorder %s26, 0
    %p284 = por %p282, %p283
    %s286 = sadd.s32 %s285, 1
    %p289 = scmp.eq.s32.totalorder %s20, 1
    %p290 = scmp.ne.s32.totalorder %s285, %s287
    %p291 = scmp.eq.s32.totalorder %s20, 0
    %p292 = por %p290, %p291
    %p293 = scmp.ne.s32.totalorder %s285, %s287
    %p294 = scmp.eq.s32.totalorder %s25, 1
    %p295 = por %p293, %p294
    %p296 = scmp.ne.s32.totalorder %s287, %s288
    %p297 = scmp.eq.s32.totalorder %s25, 0
    %p298 = por %p296, %p297
    %p299 = scmp.ne.s32.totalorder %s287, %s288
    %p300 = scmp.eq.s32.totalorder %s26, 1
    %p301 = por %p299, %p300
    %p303 = scmp.ne.s32.totalorder %s288, %s302
    %p304 = scmp.eq.s32.totalorder %s26, 0
    %p305 = por %p303, %p304
    %s307 = sadd.s32 %s306, 1
    %p310 = scmp.eq.s32.totalorder %s20, 1
    %p311 = scmp.ne.s32.totalorder %s306, %s308
    %p312 = scmp.eq.s32.totalorder %s20, 0
    %p313 = por %p311, %p312
    %p314 = scmp.ne.s32.totalorder %s306, %s308
    %p315 = scmp.eq.s32.totalorder %s25, 1
    %p316 = por %p314, %p315
    %p317 = scmp.ne.s32.totalorder %s308, %s309
    %p318 = scmp.eq.s32.totalorder %s25, 0
    %p319 = por %p317, %p318
    %p320 = scmp.ne.s32.totalorder %s308, %s309
    %p321 = scmp.eq.s32.totalorder %s26, 1
    %p322 = por %p320, %p321
    %p324 = scmp.ne.s32.totalorder %s309, %s323
    %p325 = scmp.eq.s32.totalorder %s26, 0
    %p326 = por %p324, %p325
    %s327 = ssub.s32 %s20, %s27
    %p328 = scmp.eq.s32.totalorder %s327, 0
    %s330 = sadd.s32 %s329, 1
    %s331 = scalar_select %p328, %s329, %s330
    %p334 = pneg %p328
    %p335 = scmp.eq.s32.totalorder %s20, 1
    %p336 = por %p334, %p335
    %p337 = scmp.ne.s32.totalorder %s329, %s332
    %p338 = scmp.eq.s32.totalorder %s20, 0
    %p339 = por %p337, %p338
    %p340 = scmp.ne.s32.totalorder %s329, %s332
    %p341 = scmp.eq.s32.totalorder %s25, 1
    %p342 = por %p340, %p341
    %p343 = scmp.ne.s32.totalorder %s332, %s333
    %p344 = scmp.eq.s32.totalorder %s25, 0
    %p345 = por %p343, %p344
    %p346 = scmp.ne.s32.totalorder %s332, %s333
    %p347 = scmp.eq.s32.totalorder %s26, 1
    %p348 = por %p346, %p347
    %p350 = scmp.ne.s32.totalorder %s333, %s349
    %p351 = scmp.eq.s32.totalorder %s26, 0
    %p352 = por %p350, %p351
    %p353 = scmp.le.s32.totalorder 1, %s20
    %p354 = scmp.lt.s32.totalorder %s20, 3
    %p355 = pnand %p353, %p354
    %p356 = pneg %p355
    // Predicated region
    $region9: #{dscfem_forward.1} parent=5 // pred_check
      _
    $region10: #{dscfem_forward.1} parent=5 // pred_check_branch
      %358 = sbr.rel (%p355) target = $region12
    $region11: #{dscfem_forward.1} parent=5 // pred_region
      %s359 = ssub.s32 %s20, 1
      // Predicated region
      $region13: #{dscfem_forward.1} parent=11 // pred_check
        %p360 = pneg %p67
      $region14: #{dscfem_forward.1} parent=11 // pred_check_branch
        %362 = sbr.rel (%p360) target = $region16
      $region15: #{dscfem_forward.1} parent=11 // pred_region
        _
      $region16: #{dscfem_forward.1} parent=11 // pred_fallthru
        _
      // Predicated region
      $region17: #{dscfem_forward.1} parent=11 // pred_check
        %p363 = pneg %p88
      $region18: #{dscfem_forward.1} parent=11 // pred_check_branch
        %365 = sbr.rel (%p363) target = $region20
      $region19: #{dscfem_forward.1} parent=11 // pred_region
        _
      $region20: #{dscfem_forward.1} parent=11 // pred_fallthru
        _
      // Predicated region
      $region21: #{dscfem_forward.1} parent=11 // pred_check
        %p366 = pneg %p109
      $region22: #{dscfem_forward.1} parent=11 // pred_check_branch
        %368 = sbr.rel (%p366) target = $region24
      $region23: #{dscfem_forward.1} parent=11 // pred_region
        _
      $region24: #{dscfem_forward.1} parent=11 // pred_fallthru
        _
      // Predicated region
      $region25: #{dscfem_forward.1} parent=11 // pred_check
        %p369 = pneg %p130
      $region26: #{dscfem_forward.1} parent=11 // pred_check_branch
        %371 = sbr.rel (%p369) target = $region28
      $region27: #{dscfem_forward.1} parent=11 // pred_region
        _
      $region28: #{dscfem_forward.1} parent=11 // pred_fallthru
        _
      // Predicated region
      $region29: #{dscfem_forward.1} parent=11 // pred_check
        %p372 = pneg %p151
      $region30: #{dscfem_forward.1} parent=11 // pred_check_branch
        %374 = sbr.rel (%p372) target = $region32
      $region31: #{dscfem_forward.1} parent=11 // pred_region
        _
      $region32: #{dscfem_forward.1} parent=11 // pred_fallthru
        _
      // Predicated region
      $region33: #{dscfem_forward.1} parent=11 // pred_check
        %p375 = pneg %p172
      $region34: #{dscfem_forward.1} parent=11 // pred_check_branch
        %377 = sbr.rel (%p375) target = $region36
      $region35: #{dscfem_forward.1} parent=11 // pred_region
        _
      $region36: #{dscfem_forward.1} parent=11 // pred_fallthru
        _
      // Predicated region
      $region37: #{dscfem_forward.1} parent=11 // pred_check
        %p378 = pneg %p193
      $region38: #{dscfem_forward.1} parent=11 // pred_check_branch
        %380 = sbr.rel (%p378) target = $region40
      $region39: #{dscfem_forward.1} parent=11 // pred_region
        _
      $region40: #{dscfem_forward.1} parent=11 // pred_fallthru
        _
      // Predicated region
      $region41: #{dscfem_forward.1} parent=11 // pred_check
        %p381 = pneg %p214
      $region42: #{dscfem_forward.1} parent=11 // pred_check_branch
        %383 = sbr.rel (%p381) target = $region44
      $region43: #{dscfem_forward.1} parent=11 // pred_region
        _
      $region44: #{dscfem_forward.1} parent=11 // pred_fallthru
        _
      // Predicated region
      $region45: #{dscfem_forward.1} parent=11 // pred_check
        %p384 = pneg %p235
      $region46: #{dscfem_forward.1} parent=11 // pred_check_branch
        %386 = sbr.rel (%p384) target = $region48
      $region47: #{dscfem_forward.1} parent=11 // pred_region
        _
      $region48: #{dscfem_forward.1} parent=11 // pred_fallthru
        _
      // Predicated region
      $region49: #{dscfem_forward.1} parent=11 // pred_check
        %p387 = pneg %p256
      $region50: #{dscfem_forward.1} parent=11 // pred_check_branch
        %389 = sbr.rel (%p387) target = $region52
      $region51: #{dscfem_forward.1} parent=11 // pred_region
        _
      $region52: #{dscfem_forward.1} parent=11 // pred_fallthru
        _
      // Predicated region
      $region53: #{dscfem_forward.1} parent=11 // pred_check
        %p390 = pneg %p277
      $region54: #{dscfem_forward.1} parent=11 // pred_check_branch
        %392 = sbr.rel (%p390) target = $region56
      $region55: #{dscfem_forward.1} parent=11 // pred_region
        _
      $region56: #{dscfem_forward.1} parent=11 // pred_fallthru
        _
      // Predicated region
      $region57: #{dscfem_forward.1} parent=11 // pred_check
        %p393 = pneg %p298
      $region58: #{dscfem_forward.1} parent=11 // pred_check_branch
        %395 = sbr.rel (%p393) target = $region60
      $region59: #{dscfem_forward.1} parent=11 // pred_region
        _
      $region60: #{dscfem_forward.1} parent=11 // pred_fallthru
        _
      // Predicated region
      $region61: #{dscfem_forward.1} parent=11 // pred_check
        %p396 = pneg %p319
      $region62: #{dscfem_forward.1} parent=11 // pred_check_branch
        %398 = sbr.rel (%p396) target = $region64
      $region63: #{dscfem_forward.1} parent=11 // pred_region
        _
      $region64: #{dscfem_forward.1} parent=11 // pred_fallthru
        _
    $region12: #{dscfem_forward.1} parent=5 // pred_fallthru
      _
    %p399 = scmp.lt.s32.totalorder %s20, 2
    // Predicated region
    $region65: #{dscfem_forward.1} parent=5 // pred_check
      %p400 = pneg %p399
    $region66: #{dscfem_forward.1} parent=5 // pred_check_branch
      %402 = sbr.rel (%p400) target = $region68
    $region67: #{dscfem_forward.1} parent=5 // pred_region
      // Predicated region
      $region69: #{dscfem_forward.1} parent=67 // pred_check
        %p403 = pneg %p40
      $region70: #{dscfem_forward.1} parent=67 // pred_check_branch
        %405 = sbr.rel (%p403) target = $region72
      $region71: #{dscfem_forward.1} parent=67 // pred_region
        %p406 = scmp.lt.s32.totalorder %s20, 1
        %s407 = scalar_select %p406, %s20, 1
        %s408 = smul.addr %s407, 2
        %s409 = smul.addr %s408, 4
        %s410 = scalar_lea.vmem %s0, %s409
      $region72: #{dscfem_forward.1} parent=67 // pred_fallthru
        _
    $region68: #{dscfem_forward.1} parent=5 // pred_fallthru
      _
    %p411 = scmp.le.s32.totalorder 1, %s20
    %p412 = scmp.lt.s32.totalorder %s20, 3
    %p413 = pnand %p411, %p412
    %p414 = pneg %p413
    // Predicated region
    $region73: #{dscfem_forward.1} parent=5 // pred_check
      _
    $region74: #{dscfem_forward.1} parent=5 // pred_check_branch
      %416 = sbr.rel (%p413) target = $region76
    $region75: #{dscfem_forward.1} parent=5 // pred_region
      %s417 = ssub.s32 %s20, 1
      %p418 = scmp.lt.s32.totalorder %s25, 1
      %s419 = scalar_select %p418, %s25, 1
      %s420 = smul.addr %s419, 2
      %s421 = smul.addr %s420, 4
      %s422 = scalar_lea.vmem %s0, %s421
      %p423 = pneg %p46
      %p424 = pneg %p43
      %p425 = pneg %p67
      %p426 = pneg %p64
      %p427 = pneg %p88
      %p428 = pneg %p85
      %p429 = pneg %p109
      %p430 = pneg %p106
      %p431 = pneg %p130
      %p432 = pneg %p127
      %p433 = pneg %p151
      %p434 = pneg %p148
      %p435 = pneg %p172
      %p436 = pneg %p169
      %p437 = pneg %p193
      %p438 = pneg %p190
      %p439 = pneg %p214
      %p440 = pneg %p211
      %p441 = pneg %p235
      %p442 = pneg %p232
      %p443 = pneg %p256
      %p444 = pneg %p253
      %p445 = pneg %p277
      %p446 = pneg %p274
      %p447 = pneg %p298
      %p448 = pneg %p295
      %p449 = pneg %p319
      %p450 = pneg %p316
      %p451 = pneg %p345
      %p452 = pneg %p342
      %p453 = scmp.lt.s32.totalorder %s25, 1
      %s454 = scalar_select %p453, %s25, 1
      %s455 = smul.addr %s454, 2
      %s456 = smul.addr %s455, 8
      %s457 = scalar_lea.vmem %s14, %s456
      %p458 = scmp.lt.s32.totalorder %s25, 1
      %s459 = scalar_select %p458, %s25, 1
      %s460 = smul.addr %s459, 2
      %s461 = smul.addr %s460, 4
      %s462 = scalar_lea.vmem %s0, %s461
      %p463 = scmp.lt.s32.totalorder %s25, 1
      %s464 = scalar_select %p463, %s25, 1
      %s465 = smul.addr %s464, 2
      %s466 = smul.addr %s465, 8
      %s467 = scalar_lea.vmem %s14, %s466
      %v469 = vld [vmem:[%s462] sm:$0xff]
      %v470 = vld [vmem:[%s1] sm:$0xff]
      %v471 = vld [vmem:[%s1 + $0x8] sm:$0xff]
      %v472 = vld [vmem:[%s1 + $0x10] sm:$0x1]
      %v473 = vld [vmem:[%s1 + $0x18] sm:$0x1]
      %v474 = vld [vmem:[%s2] sm:$0xf]
      %v476 = vcombine.high %v469, %v469
      %v478 = vpack.c.bf16 %v469, %v469
      %v479 = vpack.c.bf16 %v476, %v476
      %v480 = vld [vmem:[%s3] sm:$0xff]
      %482 = vset.pattern.permute.xlu0 0
      %483 = vperm.xlu0 %482, %v480
      %v484 = vpop.permute.xlu0 %483
      %vm486 = vcmask 31744
      %v488 = vsel %vm486, %v474, 0
      %vm490 = vcmask 1041408
      %v492 = vsel %vm490, %v478, 0
      %v495 = vsel %vm490, %v479, 0
      %497 = vmatprep.subr.bf16.mxu0 %v495
      %498 = vmatpush1.bf16.msra.mxu0 %v492
      %499 = vmatprep.subr.bf16.mxu0 0
      %500 = vmatpush1.bf16.msra.mxu0 0
      %501 = vmatprep.subr.bf16.mxu0 0
      %502 = vmatpush1.bf16.msra.mxu0 0
      %503 = vmatprep.subr.bf16.mxu0 0
      %504 = vmatpush1.bf16.msra.mxu0 0
      %505 = vmatprep.subr.bf16.mxu0 0
      %506 = vmatpush1.bf16.msra.mxu0 0
      %507 = vmatprep.subr.bf16.mxu0 0
      %508 = vmatpush1.bf16.msra.mxu0 0
      %509 = vmatprep.subr.bf16.mxu0 0
      %510 = vmatpush1.bf16.msra.mxu0 0
      %511 = vmatprep.subr.bf16.mxu0 0
      %512 = vmatpush1.bf16.msra.mxu0 0
      %513 = vmatprep.subr.bf16.mxu0 0
      %514 = vmatpush1.bf16.msra.mxu0 0
      %515 = vmatprep.subr.bf16.mxu0 0
      %516 = vmatpush1.bf16.msra.mxu0 0
      %517 = vmatprep.subr.bf16.mxu0 0
      %518 = vmatpush1.bf16.msra.mxu0 0
      %519 = vmatprep.subr.bf16.mxu0 0
      %520 = vmatpush1.bf16.msra.mxu0 0
      %521 = vmatprep.subr.bf16.mxu0 0
      %522 = vmatpush1.bf16.msra.mxu0 0
      %523 = vmatprep.subr.bf16.mxu0 0
      %524 = vmatpush1.bf16.msra.mxu0 0
      %525 = vmatprep.subr.bf16.mxu0 0
      %526 = vmatpush1.bf16.msra.mxu0 0
      %527 = vmatprep.subr.bf16.mxu0 0
      %528 = vmatpush1.bf16.msra.mxu0 0
      %529 = vmatprep.mubr.bf16.mxu0 0
      %530 = vmatmul.mubr.bf16.gmra.mrb[0].mxu0 %v488
      %v531 = vpop.f32.mrb[0].mxu0
      %v532 = vadd.f32 %v484, %v531
      %v533 = vpop.f32.mrb[0].mxu0
      %v534 = vadd.f32 %v484, %v533
      %v535 = vpop.f32.mrb[0].mxu0
      %v536 = vpop.f32.mrb[0].mxu0
      %537 = vdwg.mxu0
      %v538 = vxor.u32 %v532, 2147483648
      %v539 = vxor.u32 %v534, 2147483648
      %v540 = vmul.f32 %v538, 1.442695
      %v541 = vpow.pop %v540
      %v542 = vmul.f32 %v539, 1.442695
      %v543 = vpow.pop %v542
      %v544 = vadd.f32 %v541, 1.0
      %v545 = vadd.f32 %v543, 1.0
      %v546 = vrcp.pop %v544
      %v547 = vmul.f32 1.0, %v546
      %v548 = vrcp.pop %v545
      %v549 = vmul.f32 1.0, %v548
      %v550 = vmul.f32 %v532, %v547
      %v551 = vmul.f32 %v534, %v549
      %v552 = vld [vmem:[%s4] sm:$0xf]
      %v553 = vpack.c.bf16 %v550, %v550
      %v554 = vpack.c.bf16 %v551, %v551
      %v555 = vld [vmem:[%s5] sm:$0xff]
      %557 = vset.pattern.permute.xlu0 0
      %558 = vperm.xlu0 %557, %v555
      %v559 = vpop.permute.xlu0 %558
      %v562 = vsel %vm486, %v552, 0
      %v565 = vsel %vm490, %v553, 0
      %v568 = vsel %vm490, %v554, 0
      %570 = vmatprep.subr.bf16.mxu0 %v568
      %571 = vmatpush1.bf16.msra.mxu0 %v565
      %572 = vmatprep.subr.bf16.mxu0 0
      %573 = vmatpush1.bf16.msra.mxu0 0
      %574 = vmatprep.subr.bf16.mxu0 0
      %575 = vmatpush1.bf16.msra.mxu0 0
      %576 = vmatprep.subr.bf16.mxu0 0
      %577 = vmatpush1.bf16.msra.mxu0 0
      %578 = vmatprep.subr.bf16.mxu0 0
      %579 = vmatpush1.bf16.msra.mxu0 0
      %580 = vmatprep.subr.bf16.mxu0 0
      %581 = vmatpush1.bf16.msra.mxu0 0
      %582 = vmatprep.subr.bf16.mxu0 0
      %583 = vmatpush1.bf16.msra.mxu0 0
      %584 = vmatprep.subr.bf16.mxu0 0
      %585 = vmatpush1.bf16.msra.mxu0 0
      %586 = vmatprep.subr.bf16.mxu0 0
      %587 = vmatpush1.bf16.msra.mxu0 0
      %588 = vmatprep.subr.bf16.mxu0 0
      %589 = vmatpush1.bf16.msra.mxu0 0
      %590 = vmatprep.subr.bf16.mxu0 0
      %591 = vmatpush1.bf16.msra.mxu0 0
      %592 = vmatprep.subr.bf16.mxu0 0
      %593 = vmatpush1.bf16.msra.mxu0 0
      %594 = vmatprep.subr.bf16.mxu0 0
      %595 = vmatpush1.bf16.msra.mxu0 0
      %596 = vmatprep.subr.bf16.mxu0 0
      %597 = vmatpush1.bf16.msra.mxu0 0
      %598 = vmatprep.subr.bf16.mxu0 0
      %599 = vmatpush1.bf16.msra.mxu0 0
      %600 = vmatprep.subr.bf16.mxu0 0
      %601 = vmatpush1.bf16.msra.mxu0 0
      %602 = vmatprep.mubr.bf16.mxu0 0
      %603 = vmatmul.mubr.bf16.gmra.mrb[0].mxu0 %v562
      %v604 = vpop.f32.mrb[0].mxu0
      %v605 = vadd.f32 %v559, %v604
      %v606 = vpop.f32.mrb[0].mxu0
      %v607 = vadd.f32 %v559, %v606
      %v608 = vpop.f32.mrb[0].mxu0
      %v609 = vpop.f32.mrb[0].mxu0
      %610 = vdwg.mxu0
      %v611 = vxor.u32 %v605, 2147483648
      %v612 = vxor.u32 %v607, 2147483648
      %v613 = vmul.f32 %v611, 1.442695
      %v614 = vpow.pop %v613
      %v615 = vmul.f32 %v612, 1.442695
      %v616 = vpow.pop %v615
      %v617 = vadd.f32 %v614, 1.0
      %v618 = vadd.f32 %v616, 1.0
      %v619 = vrcp.pop %v617
      %v620 = vmul.f32 1.0, %v619
      %v621 = vrcp.pop %v618
      %v622 = vmul.f32 1.0, %v621
      %v623 = vmul.f32 %v605, %v620
      %v624 = vmul.f32 %v607, %v622
      %625 = vrot.lane.b32.xlu0 %v623, 17
      %v626 = vpop.permute.xlu0 %625
      %627 = vrot.lane.b32.xlu0 %v624, 17
      %v628 = vpop.permute.xlu0 %627
      %v629 = vlaneseq
      %v630 = vand.u32 %v629, 127
      %vm631 = vcmp.lt.s32.totalorder %v630, 17
      %v632 = vsel %vm631, %v626, %v628
      %v633 = vsel %vm631, %v628, %v626
      %v634 = vlaneseq
      %v635 = vshrl.u32 %v634, 7
      %v636 = vsub.s32 0, %v635
      %v637 = vrot.slane %v470, %v636
      %v638 = vlaneseq
      %v639 = vshrl.u32 %v638, 7
      %v640 = vsub.s32 0, %v639
      %v641 = vrot.slane %v471, %v640
      %v642 = vmul.f32 %v633, %v637
      %v643 = vmul.f32 %v632, %v641
      %644 = vrot.lane.b32.xlu0 %v623, 16
      %v645 = vpop.permute.xlu0 %644
      %646 = vrot.lane.b32.xlu0 %v624, 16
      %v647 = vpop.permute.xlu0 %646
      %vm648 = vcmp.lt.s32.totalorder %v630, 16
      %v649 = vsel %vm648, %v645, %v647
      %v650 = vsel %vm648, %v647, %v645
      %v651 = vlaneseq
      %v652 = vshrl.u32 %v651, 7
      %v653 = vsub.s32 1, %v652
      %v654 = vrot.slane %v470, %v653
      %v655 = vlaneseq
      %v656 = vshrl.u32 %v655, 7
      %v657 = vsub.s32 1, %v656
      %v658 = vrot.slane %v471, %v657
      %v659 = vmul.f32 %v650, %v654
      %v660 = vmul.f32 %v649, %v658
      %661 = vrot.lane.b32.xlu0 %v623, 15
      %v662 = vpop.permute.xlu0 %661
      %663 = vrot.lane.b32.xlu0 %v624, 15
      %v664 = vpop.permute.xlu0 %663
      %vm665 = vcmp.lt.s32.totalorder %v630, 15
      %v666 = vsel %vm665, %v662, %v664
      %v667 = vsel %vm665, %v664, %v662
      %v668 = vlaneseq
      %v669 = vshrl.u32 %v668, 7
      %v670 = vsub.s32 2, %v669
      %v671 = vrot.slane %v470, %v670
      %v672 = vlaneseq
      %v673 = vshrl.u32 %v672, 7
      %v674 = vsub.s32 2, %v673
      %v675 = vrot.slane %v471, %v674
      %v676 = vmul.f32 %v667, %v671
      %v677 = vmul.f32 %v666, %v675
      %678 = vrot.lane.b32.xlu0 %v623, 1
      %v679 = vpop.permute.xlu0 %678
      %680 = vrot.lane.b32.xlu0 %v624, 1
      %v681 = vpop.permute.xlu0 %680
      %vm682 = vcmp.lt.s32.totalorder %v630, 1
      %v683 = vsel %vm682, %v679, %v681
      %v684 = vsel %vm682, %v681, %v679
      %v685 = vlaneseq
      %v686 = vshrl.u32 %v685, 7
      %v687 = vsub.s32 3, %v686
      %v688 = vrot.slane %v470, %v687
      %v689 = vlaneseq
      %v690 = vshrl.u32 %v689, 7
      %v691 = vsub.s32 3, %v690
      %v692 = vrot.slane %v471, %v691
      %v693 = vmul.f32 %v684, %v688
      %v694 = vmul.f32 %v683, %v692
      %695 = vrot.lane.b32.xlu0 %v623, 127
      %v696 = vpop.permute.xlu0 %695
      %697 = vrot.lane.b32.xlu0 %v624, 127
      %v698 = vpop.permute.xlu0 %697
      %vm699 = vcmp.lt.s32.totalorder %v630, 127
      %v700 = vsel %vm699, %v696, %v698
      %v701 = vsel %vm699, %v698, %v696
      %v702 = vlaneseq
      %v703 = vshrl.u32 %v702, 7
      %v704 = vsub.s32 5, %v703
      %v705 = vrot.slane %v470, %v704
      %v706 = vlaneseq
      %v707 = vshrl.u32 %v706, 7
      %v708 = vsub.s32 5, %v707
      %v709 = vrot.slane %v471, %v708
      %v710 = vmul.f32 %v700, %v705
      %v711 = vmul.f32 %v701, %v709
      %712 = vrot.lane.b32.xlu0 %v623, 113
      %v713 = vpop.permute.xlu0 %712
      %714 = vrot.lane.b32.xlu0 %v624, 113
      %v715 = vpop.permute.xlu0 %714
      %vm716 = vcmp.lt.s32.totalorder %v630, 113
      %v717 = vsel %vm716, %v713, %v715
      %v718 = vsel %vm716, %v715, %v713
      %v719 = vlaneseq
      %v720 = vshrl.u32 %v719, 7
      %v721 = vsub.s32 6, %v720
      %v722 = vrot.slane %v470, %v721
      %v723 = vlaneseq
      %v724 = vshrl.u32 %v723, 7
      %v725 = vsub.s32 6, %v724
      %v726 = vrot.slane %v471, %v725
      %v727 = vmul.f32 %v717, %v722
      %v728 = vmul.f32 %v718, %v726
      %729 = vrot.lane.b32.xlu0 %v623, 112
      %v730 = vpop.permute.xlu0 %729
      %731 = vrot.lane.b32.xlu0 %v624, 112
      %v732 = vpop.permute.xlu0 %731
      %vm733 = vcmp.lt.s32.totalorder %v630, 112
      %v734 = vsel %vm733, %v730, %v732
      %v735 = vsel %vm733, %v732, %v730
      %v736 = vlaneseq
      %v737 = vshrl.u32 %v736, 7
      %v738 = vsub.s32 7, %v737
      %v739 = vrot.slane %v470, %v738
      %v740 = vlaneseq
      %v741 = vshrl.u32 %v740, 7
      %v742 = vsub.s32 7, %v741
      %v743 = vrot.slane %v471, %v742
      %v744 = vmul.f32 %v734, %v739
      %v745 = vmul.f32 %v735, %v743
      %746 = vrot.lane.b32.xlu0 %v623, 111
      %v747 = vpop.permute.xlu0 %746
      %748 = vrot.lane.b32.xlu0 %v624, 111
      %v749 = vpop.permute.xlu0 %748
      %vm750 = vcmp.lt.s32.totalorder %v630, 111
      %v751 = vsel %vm750, %v747, %v749
      %v752 = vsel %vm750, %v749, %v747
      %v753 = vlaneseq
      %v754 = vshrl.u32 %v753, 7
      %v755 = vsub.s32 0, %v754
      %v756 = vrot.slane %v472, %v755
      %v757 = vlaneseq
      %v758 = vshrl.u32 %v757, 7
      %v759 = vsub.s32 0, %v758
      %v760 = vrot.slane %v473, %v759
      %v761 = vmul.f32 %v751, %v756
      %v762 = vmul.f32 %v752, %v760
      %v765 = vrot.slane %v659, 4
      %v766 = vrot.slane %v660, 4
      %v771 = vrot.slane %v693, 4
      %v772 = vrot.slane %v694, 4
      %v777 = vrot.slane %v710, 4
      %v778 = vrot.slane %v711, 4
      %v783 = vrot.slane %v744, 4
      %v784 = vrot.slane %v745, 4
      %vm787 = vcmask 1043456
      %v788 = vsel %vm787, %v642, %v765
      %v789 = vsel %vm787, %v643, %v766
      %v790 = vsel %vm787, %v676, %v771
      %v791 = vsel %vm787, %v677, %v772
      %v792 = vsel %vm787, %v623, %v777
      %v793 = vsel %vm787, %v624, %v778
      %v794 = vsel %vm787, %v727, %v783
      %v795 = vsel %vm787, %v728, %v784
      %v796 = vld [vmem:[%s6] sm:$0x3]
      %v797 = vpack.c.bf16 %v790, %v788
      %v798 = vpack.c.bf16 %v791, %v789
      %v799 = vpack.c.bf16 %v794, %v792
      %v800 = vpack.c.bf16 %v795, %v793
      %v801 = vpack.c.bf16 %v761, %v761
      %v802 = vpack.c.bf16 %v762, %v762
      %v803 = vld [vmem:[%s7] sm:$0xf]
      %805 = vset.pattern.permute.xlu0 0
      %806 = vperm.xlu0 %805, %v803
      %v807 = vpop.permute.xlu0 %806
      %vm809 = vcmask 293888
      %v811 = vsel %vm809, %v796, 0
      %v814 = vsel %vm490, %v801, 0
      %v817 = vsel %vm490, %v802, 0
      %819 = vmatprep.subr.bf16.mxu0 %v798
      %820 = vmatpush1.bf16.msra.mxu0 %v797
      %821 = vmatprep.subr.bf16.mxu0 %v800
      %822 = vmatpush1.bf16.msra.mxu0 %v799
      %823 = vmatprep.subr.bf16.mxu0 %v817
      %824 = vmatpush1.bf16.msra.mxu0 %v814
      %825 = vmatprep.subr.bf16.mxu0 0
      %826 = vmatpush1.bf16.msra.mxu0 0
      %827 = vmatprep.subr.bf16.mxu0 0
      %828 = vmatpush1.bf16.msra.mxu0 0
      %829 = vmatprep.subr.bf16.mxu0 0
      %830 = vmatpush1.bf16.msra.mxu0 0
      %831 = vmatprep.subr.bf16.mxu0 0
      %832 = vmatpush1.bf16.msra.mxu0 0
      %833 = vmatprep.subr.bf16.mxu0 0
      %834 = vmatpush1.bf16.msra.mxu0 0
      %835 = vmatprep.subr.bf16.mxu0 0
      %836 = vmatpush1.bf16.msra.mxu0 0
      %837 = vmatprep.subr.bf16.mxu0 0
      %838 = vmatpush1.bf16.msra.mxu0 0
      %839 = vmatprep.subr.bf16.mxu0 0
      %840 = vmatpush1.bf16.msra.mxu0 0
      %841 = vmatprep.subr.bf16.mxu0 0
      %842 = vmatpush1.bf16.msra.mxu0 0
      %843 = vmatprep.subr.bf16.mxu0 0
      %844 = vmatpush1.bf16.msra.mxu0 0
      %845 = vmatprep.subr.bf16.mxu0 0
      %846 = vmatpush1.bf16.msra.mxu0 0
      %847 = vmatprep.subr.bf16.mxu0 0
      %848 = vmatpush1.bf16.msra.mxu0 0
      %849 = vmatprep.subr.bf16.mxu0 0
      %850 = vmatpush1.bf16.msra.mxu0 0
      %851 = vmatprep.mubr.bf16.mxu0 0
      %852 = vmatmul.mubr.bf16.gmra.mrb[0].mxu0 %v811
      %v853 = vpop.f32.mrb[0].mxu0
      %v854 = vadd.f32 %v807, %v853
      %v855 = vpop.f32.mrb[0].mxu0
      %v856 = vadd.f32 %v807, %v855
      %v857 = vpop.f32.mrb[0].mxu0
      %v858 = vpop.f32.mrb[0].mxu0
      %859 = vdwg.mxu0
      %v860 = vxor.u32 %v854, 2147483648
      %v861 = vxor.u32 %v856, 2147483648
      %v862 = vmul.f32 %v860, 1.442695
      %v863 = vpow.pop %v862
      %v864 = vmul.f32 %v861, 1.442695
      %v865 = vpow.pop %v864
      %v866 = vadd.f32 %v863, 1.0
      %v867 = vadd.f32 %v865, 1.0
      %v868 = vrcp.pop %v866
      %v869 = vmul.f32 1.0, %v868
      %v870 = vrcp.pop %v867
      %v871 = vmul.f32 1.0, %v870
      %v872 = vmul.f32 %v854, %v869
      %v873 = vmul.f32 %v856, %v871
      %874 = vrot.lane.b32.xlu0 %v872, 17
      %v875 = vpop.permute.xlu0 %874
      %876 = vrot.lane.b32.xlu0 %v873, 17
      %v877 = vpop.permute.xlu0 %876
      %v878 = vsel %vm631, %v875, %v877
      %v879 = vsel %vm631, %v877, %v875
      %v880 = vmul.f32 %v879, %v637
      %v881 = vmul.f32 %v878, %v641
      %882 = vrot.lane.b32.xlu0 %v872, 16
      %v883 = vpop.permute.xlu0 %882
      %884 = vrot.lane.b32.xlu0 %v873, 16
      %v885 = vpop.permute.xlu0 %884
      %v886 = vsel %vm648, %v883, %v885
      %v887 = vsel %vm648, %v885, %v883
      %v888 = vmul.f32 %v887, %v654
      %v889 = vmul.f32 %v886, %v658
      %890 = vrot.lane.b32.xlu0 %v872, 15
      %v891 = vpop.permute.xlu0 %890
      %892 = vrot.lane.b32.xlu0 %v873, 15
      %v893 = vpop.permute.xlu0 %892
      %v894 = vsel %vm665, %v891, %v893
      %v895 = vsel %vm665, %v893, %v891
      %v896 = vmul.f32 %v895, %v671
      %v897 = vmul.f32 %v894, %v675
      %898 = vrot.lane.b32.xlu0 %v872, 1
      %v899 = vpop.permute.xlu0 %898
      %900 = vrot.lane.b32.xlu0 %v873, 1
      %v901 = vpop.permute.xlu0 %900
      %v902 = vsel %vm682, %v899, %v901
      %v903 = vsel %vm682, %v901, %v899
      %v904 = vmul.f32 %v903, %v688
      %v905 = vmul.f32 %v902, %v692
      %906 = vrot.lane.b32.xlu0 %v872, 127
      %v907 = vpop.permute.xlu0 %906
      %908 = vrot.lane.b32.xlu0 %v873, 127
      %v909 = vpop.permute.xlu0 %908
      %v910 = vsel %vm699, %v907, %v909
      %v911 = vsel %vm699, %v909, %v907
      %v912 = vmul.f32 %v910, %v705
      %v913 = vmul.f32 %v911, %v709
      %914 = vrot.lane.b32.xlu0 %v872, 113
      %v915 = vpop.permute.xlu0 %914
      %916 = vrot.lane.b32.xlu0 %v873, 113
      %v917 = vpop.permute.xlu0 %916
      %v918 = vsel %vm716, %v915, %v917
      %v919 = vsel %vm716, %v917, %v915
      %v920 = vmul.f32 %v918, %v722
      %v921 = vmul.f32 %v919, %v726
      %922 = vrot.lane.b32.xlu0 %v872, 112
      %v923 = vpop.permute.xlu0 %922
      %924 = vrot.lane.b32.xlu0 %v873, 112
      %v925 = vpop.permute.xlu0 %924
      %v926 = vsel %vm733, %v923, %v925
      %v927 = vsel %vm733, %v925, %v923
      %v928 = vmul.f32 %v926, %v739
      %v929 = vmul.f32 %v927, %v743
      %930 = vrot.lane.b32.xlu0 %v872, 111
      %v931 = vpop.permute.xlu0 %930
      %932 = vrot.lane.b32.xlu0 %v873, 111
      %v933 = vpop.permute.xlu0 %932
      %v934 = vsel %vm750, %v931, %v933
      %v935 = vsel %vm750, %v933, %v931
      %v936 = vmul.f32 %v934, %v756
      %v937 = vmul.f32 %v935, %v760
      %v940 = vrot.slane %v888, 4
      %v941 = vrot.slane %v889, 4
      %v946 = vrot.slane %v904, 4
      %v947 = vrot.slane %v905, 4
      %v952 = vrot.slane %v912, 4
      %v953 = vrot.slane %v913, 4
      %v958 = vrot.slane %v928, 4
      %v959 = vrot.slane %v929, 4
      %v962 = vsel %vm787, %v880, %v940
      %v963 = vsel %vm787, %v881, %v941
      %v964 = vsel %vm787, %v896, %v946
      %v965 = vsel %vm787, %v897, %v947
      %v966 = vsel %vm787, %v872, %v952
      %v967 = vsel %vm787, %v873, %v953
      %v968 = vsel %vm787, %v920, %v958
      %v969 = vsel %vm787, %v921, %v959
      %v970 = vld [vmem:[%s8] sm:$0x3]
      %v971 = vpack.c.bf16 %v964, %v962
      %v972 = vpack.c.bf16 %v965, %v963
      %v973 = vpack.c.bf16 %v968, %v966
      %v974 = vpack.c.bf16 %v969, %v967
      %v975 = vpack.c.bf16 %v936, %v936
      %v976 = vpack.c.bf16 %v937, %v937
      %v977 = vld [vmem:[%s9] sm:$0xf]
      %979 = vset.pattern.permute.xlu0 0
      %980 = vperm.xlu0 %979, %v977
      %v981 = vpop.permute.xlu0 %980
      %v984 = vsel %vm809, %v970, 0
      %v987 = vsel %vm490, %v975, 0
      %v990 = vsel %vm490, %v976, 0
      %992 = vmatprep.subr.bf16.mxu0 %v972
      %993 = vmatpush1.bf16.msra.mxu0 %v971
      %994 = vmatprep.subr.bf16.mxu0 %v974
      %995 = vmatpush1.bf16.msra.mxu0 %v973
      %996 = vmatprep.subr.bf16.mxu0 %v990
      %997 = vmatpush1.bf16.msra.mxu0 %v987
      %998 = vmatprep.subr.bf16.mxu0 0
      %999 = vmatpush1.bf16.msra.mxu0 0
      %1000 = vmatprep.subr.bf16.mxu0 0
      %1001 = vmatpush1.bf16.msra.mxu0 0
      %1002 = vmatprep.subr.bf16.mxu0 0
      %1003 = vmatpush1.bf16.msra.mxu0 0
      %1004 = vmatprep.subr.bf16.mxu0 0
      %1005 = vmatpush1.bf16.msra.mxu0 0
      %1006 = vmatprep.subr.bf16.mxu0 0
      %1007 = vmatpush1.bf16.msra.mxu0 0
      %1008 = vmatprep.subr.bf16.mxu0 0
      %1009 = vmatpush1.bf16.msra.mxu0 0
      %1010 = vmatprep.subr.bf16.mxu0 0
      %1011 = vmatpush1.bf16.msra.mxu0 0
      %1012 = vmatprep.subr.bf16.mxu0 0
      %1013 = vmatpush1.bf16.msra.mxu0 0
      %1014 = vmatprep.subr.bf16.mxu0 0
      %1015 = vmatpush1.bf16.msra.mxu0 0
      %1016 = vmatprep.subr.bf16.mxu0 0
      %1017 = vmatpush1.bf16.msra.mxu0 0
      %1018 = vmatprep.subr.bf16.mxu0 0
      %1019 = vmatpush1.bf16.msra.mxu0 0
      %1020 = vmatprep.subr.bf16.mxu0 0
      %1021 = vmatpush1.bf16.msra.mxu0 0
      %1022 = vmatprep.subr.bf16.mxu0 0
      %1023 = vmatpush1.bf16.msra.mxu0 0
      %1024 = vmatprep.mubr.bf16.mxu0 0
      %1025 = vmatmul.mubr.bf16.gmra.mrb[0].mxu0 %v984
      %v1026 = vpop.f32.mrb[0].mxu0
      %v1027 = vadd.f32 %v981, %v1026
      %v1028 = vpop.f32.mrb[0].mxu0
      %v1029 = vadd.f32 %v981, %v1028
      %v1030 = vpop.f32.mrb[0].mxu0
      %v1031 = vpop.f32.mrb[0].mxu0
      %1032 = vdwg.mxu0
      %v1033 = vxor.u32 %v1027, 2147483648
      %v1034 = vxor.u32 %v1029, 2147483648
      %v1035 = vmul.f32 %v1033, 1.442695
      %v1036 = vpow.pop %v1035
      %v1037 = vmul.f32 %v1034, 1.442695
      %v1038 = vpow.pop %v1037
      %v1039 = vadd.f32 %v1036, 1.0
      %v1040 = vadd.f32 %v1038, 1.0
      %v1041 = vrcp.pop %v1039
      %v1042 = vmul.f32 1.0, %v1041
      %v1043 = vrcp.pop %v1040
      %v1044 = vmul.f32 1.0, %v1043
      %v1045 = vmul.f32 %v1027, %v1042
      %v1046 = vmul.f32 %v1029, %v1044
      %v1047 = vadd.f32 %v623, %v1045
      %v1048 = vadd.f32 %v624, %v1046
      %v1049 = vsel %vm787, %v1047, %v623
      %v1050 = vsel %vm787, %v1048, %v624
      %v1051 = vld [vmem:[%s10] sm:$0x3]
      %v1052 = vpack.c.bf16 %v1049, %v1049
      %v1053 = vpack.c.bf16 %v1050, %v1050
      %v1054 = vld [vmem:[%s11] sm:$0xf]
      %1056 = vset.pattern.permute.xlu0 0
      %1057 = vperm.xlu0 %1056, %v1054
      %v1058 = vpop.permute.xlu0 %1057
      %vm1060 = vcmask 64512
      %v1062 = vsel %vm1060, %v1051, 0
      %v1065 = vsel %vm787, %v1052, 0
      %v1068 = vsel %vm787, %v1053, 0
      %1070 = vmatprep.subr.bf16.mxu0 %v1068
      %1071 = vmatpush1.bf16.msra.mxu0 %v1065
      %1072 = vmatprep.subr.bf16.mxu0 0
      %1073 = vmatpush1.bf16.msra.mxu0 0
      %1074 = vmatprep.subr.bf16.mxu0 0
      %1075 = vmatpush1.bf16.msra.mxu0 0
      %1076 = vmatprep.subr.bf16.mxu0 0
      %1077 = vmatpush1.bf16.msra.mxu0 0
      %1078 = vmatprep.subr.bf16.mxu0 0
      %1079 = vmatpush1.bf16.msra.mxu0 0
      %1080 = vmatprep.subr.bf16.mxu0 0
      %1081 = vmatpush1.bf16.msra.mxu0 0
      %1082 = vmatprep.subr.bf16.mxu0 0
      %1083 = vmatpush1.bf16.msra.mxu0 0
      %1084 = vmatprep.subr.bf16.mxu0 0
      %1085 = vmatpush1.bf16.msra.mxu0 0
      %1086 = vmatprep.subr.bf16.mxu0 0
      %1087 = vmatpush1.bf16.msra.mxu0 0
      %1088 = vmatprep.subr.bf16.mxu0 0
      %1089 = vmatpush1.bf16.msra.mxu0 0
      %1090 = vmatprep.subr.bf16.mxu0 0
      %1091 = vmatpush1.bf16.msra.mxu0 0
      %1092 = vmatprep.subr.bf16.mxu0 0
      %1093 = vmatpush1.bf16.msra.mxu0 0
      %1094 = vmatprep.subr.bf16.mxu0 0
      %1095 = vmatpush1.bf16.msra.mxu0 0
      %1096 = vmatprep.subr.bf16.mxu0 0
      %1097 = vmatpush1.bf16.msra.mxu0 0
      %1098 = vmatprep.subr.bf16.mxu0 0
      %1099 = vmatpush1.bf16.msra.mxu0 0
      %1100 = vmatprep.subr.bf16.mxu0 0
      %1101 = vmatpush1.bf16.msra.mxu0 0
      %1102 = vmatprep.mubr.bf16.mxu0 0
      %1103 = vmatmul.mubr.bf16.gmra.mrb[0].mxu0 %v1062
      %v1104 = vpop.f32.mrb[0].mxu0
      %v1105 = vadd.f32 %v1058, %v1104
      %v1106 = vpop.f32.mrb[0].mxu0
      %v1107 = vadd.f32 %v1058, %v1106
      %v1108 = vpop.f32.mrb[0].mxu0
      %v1109 = vpop.f32.mrb[0].mxu0
      %1110 = vdwg.mxu0
      %v1111 = vxor.u32 %v1105, 2147483648
      %v1112 = vxor.u32 %v1107, 2147483648
      %v1113 = vmul.f32 %v1111, 1.442695
      %v1114 = vpow.pop %v1113
      %v1115 = vmul.f32 %v1112, 1.442695
      %v1116 = vpow.pop %v1115
      %v1117 = vadd.f32 %v1114, 1.0
      %v1118 = vadd.f32 %v1116, 1.0
      %v1119 = vrcp.pop %v1117
      %v1120 = vmul.f32 1.0, %v1119
      %v1121 = vrcp.pop %v1118
      %v1122 = vmul.f32 1.0, %v1121
      %v1123 = vmul.f32 %v1105, %v1120
      %v1124 = vmul.f32 %v1107, %v1122
      %v1125 = vsel %vm787, %v1123, %v550
      %v1126 = vsel %vm787, %v1124, %v551
      %v1127 = vld [vmem:[%s12] sm:$0xf]
      %v1128 = vpack.c.bf16 %v1125, %v1125
      %v1129 = vpack.c.bf16 %v1126, %v1126
      %v1130 = vld [vmem:[%s13] sm:$0xff]
      %1132 = vset.pattern.permute.xlu0 0
      %1133 = vperm.xlu0 %1132, %v1130
      %v1134 = vpop.permute.xlu0 %1133
      %v1137 = vsel %vm1060, %v1127, 0
      %v1140 = vsel %vm787, %v1128, 0
      %v1143 = vsel %vm787, %v1129, 0
      %1145 = vmatprep.subr.bf16.mxu0 %v1143
      %1146 = vmatpush1.bf16.msra.mxu0 %v1140
      %1147 = vmatprep.subr.bf16.mxu0 0
      %1148 = vmatpush1.bf16.msra.mxu0 0
      %1149 = vmatprep.subr.bf16.mxu0 0
      %1150 = vmatpush1.bf16.msra.mxu0 0
      %1151 = vmatprep.subr.bf16.mxu0 0
      %1152 = vmatpush1.bf16.msra.mxu0 0
      %1153 = vmatprep.subr.bf16.mxu0 0
      %1154 = vmatpush1.bf16.msra.mxu0 0
      %1155 = vmatprep.subr.bf16.mxu0 0
      %1156 = vmatpush1.bf16.msra.mxu0 0
      %1157 = vmatprep.subr.bf16.mxu0 0
      %1158 = vmatpush1.bf16.msra.mxu0 0
      %1159 = vmatprep.subr.bf16.mxu0 0
      %1160 = vmatpush1.bf16.msra.mxu0 0
      %1161 = vmatprep.subr.bf16.mxu0 0
      %1162 = vmatpush1.bf16.msra.mxu0 0
      %1163 = vmatprep.subr.bf16.mxu0 0
      %1164 = vmatpush1.bf16.msra.mxu0 0
      %1165 = vmatprep.subr.bf16.mxu0 0
      %1166 = vmatpush1.bf16.msra.mxu0 0
      %1167 = vmatprep.subr.bf16.mxu0 0
      %1168 = vmatpush1.bf16.msra.mxu0 0
      %1169 = vmatprep.subr.bf16.mxu0 0
      %1170 = vmatpush1.bf16.msra.mxu0 0
      %1171 = vmatprep.subr.bf16.mxu0 0
      %1172 = vmatpush1.bf16.msra.mxu0 0
      %1173 = vmatprep.subr.bf16.mxu0 0
      %1174 = vmatpush1.bf16.msra.mxu0 0
      %1175 = vmatprep.subr.bf16.mxu0 0
      %1176 = vmatpush1.bf16.msra.mxu0 0
      %1177 = vmatprep.mubr.bf16.mxu0 0
      %1178 = vmatmul.mubr.bf16.gmra.mrb[0].mxu0 %v1137
      %v1179 = vpop.f32.mrb[0].mxu0
      %v1180 = vadd.f32 %v1134, %v1179
      %v1181 = vpop.f32.mrb[0].mxu0
      %v1182 = vadd.f32 %v1134, %v1181
      %v1183 = vpop.f32.mrb[0].mxu0
      %v1184 = vpop.f32.mrb[0].mxu0
      %1185 = vdwg.mxu0
      %v1186 = vxor.u32 %v1180, 2147483648
      %v1187 = vxor.u32 %v1182, 2147483648
      %v1188 = vmul.f32 %v1186, 1.442695
      %v1189 = vpow.pop %v1188
      %v1190 = vmul.f32 %v1187, 1.442695
      %v1191 = vpow.pop %v1190
      %v1192 = vadd.f32 %v1189, 1.0
      %v1193 = vadd.f32 %v1191, 1.0
      %v1194 = vrcp.pop %v1192
      %v1195 = vmul.f32 1.0, %v1194
      %v1196 = vrcp.pop %v1193
      %v1197 = vmul.f32 1.0, %v1196
      %v1198 = vmul.f32 %v1180, %v1195
      %v1199 = vmul.f32 %v1182, %v1197
      %1200 = vst [vmem:[%s467] sm:$0xff] %v1198
      %1201 = vst [vmem:[%s467 + $0x8] sm:$0xff] %v1199
      %p1202 = scmp.lt.s32.totalorder %s25, 1
      %s1203 = scalar_select %p1202, %s25, 1
      %s1204 = smul.addr %s1203, 2
      %s1205 = smul.addr %s1204, 8
      %s1206 = scalar_lea.vmem %s14, %s1205
      // Predicated region
      $region77: #{dscfem_forward.1} parent=75 // pred_check
        %p1207 = pneg %p342
      $region78: #{dscfem_forward.1} parent=75 // pred_check_branch
        %1209 = sbr.rel (%p1207) target = $region80
      $region79: #{dscfem_forward.1} parent=75 // pred_region
        _
      $region80: #{dscfem_forward.1} parent=75 // pred_fallthru
        _
    $region76: #{dscfem_forward.1} parent=5 // pred_fallthru
      _
    %p1210 = scmp.le.s32.totalorder 2, %s20
    // Predicated region
    $region81: #{dscfem_forward.1} parent=5 // pred_check
      %p1211 = pneg %p1210
    $region82: #{dscfem_forward.1} parent=5 // pred_check_branch
      %1213 = sbr.rel (%p1211) target = $region84
    $region83: #{dscfem_forward.1} parent=5 // pred_region
      %s1214 = ssub.s32 %s20, 2
      // Predicated region
      $region85: #{dscfem_forward.1} parent=83 // pred_check
        %p1215 = pneg %p348
      $region86: #{dscfem_forward.1} parent=83 // pred_check_branch
        %1217 = sbr.rel (%p1215) target = $region88
      $region87: #{dscfem_forward.1} parent=83 // pred_region
        %p1218 = scmp.lt.s32.totalorder %s26, 1
        %s1219 = scalar_select %p1218, %s26, 1
        %s1220 = smul.addr %s1219, 2
        %s1221 = smul.addr %s1220, 8
        %s1222 = scalar_lea.vmem %s14, %s1221
      $region88: #{dscfem_forward.1} parent=83 // pred_fallthru
        _
    $region84: #{dscfem_forward.1} parent=5 // pred_fallthru
      _
  $region6: #{dscfem_forward.1} parent=0 // loop_footer
    %s24 = sadd.s32 1, %s20
  $region7: #{dscfem_forward.1} parent=0 // loop_footer_branch
    %19 = sbr.rel target = $region3
  $region8: #{dscfem_forward.1} parent=0 // loop_exit
    _

</llo_original>
